<compile_context>
chip_gen: v7x
topology: tpu7x:2x2x1
jax: 0.10.0
libtpu: 0.0.40
codegen_flags: <defaults>
</compile_context>

<pallas_src>
import jax
import jax.numpy as jnp
from jax import lax
from jax.experimental import pallas as pl
from jax.experimental.pallas import tpu as pltpu


def _round_up(n: int, m: int) -> int:
    return ((n + m - 1) // m) * m


def _stacked_rnn_kernel(x_hbm, h0_ref, w_ref, u_ref, b_ref,   # inputs
                        y_ref, hid_ref):                      # outputs (no scratch)
    bt = pl.program_id(0)
    L, TB, Dp = y_ref.shape

    # Layer 0: seed the resident layer-output block straight from HBM.
    @pl.when(pl.program_id(1) == 0)
    def _():
        pltpu.sync_copy(x_hbm.at[bt], y_ref)

    W = w_ref[...]            # (Dp, Dp)
    U = u_ref[...]            # (Dp, Dp)
    b = b_ref[...]            # (1, Dp)

    # Precompute x_t @ W + b for all timesteps with one big MXU matmul and
    # write it back in place into y_ref (no scratch buffer).  TB is a multiple
    # of 8 and Dp of 128, so the reshape is layout-preserving.
    xw = jnp.dot(y_ref[...].reshape(L * TB, Dp), W,
                 preferred_element_type=jnp.float32) + b
    y_ref[...] = xw.reshape(L, TB, Dp)

    # Sequential scan over time: h_t = tanh(xW_t + h_{t-1} @ U).  Each step
    # reads its y_ref slot (holding xW_t) before overwriting it with h_t, and
    # stores h_t directly into this layer's hid output block.
    def step(t, h):
        h_new = jnp.tanh(y_ref[t] +
                         jnp.dot(h, U, preferred_element_type=jnp.float32))
        y_ref[t] = h_new      # layer output == next layer's x
        hid_ref[t] = h_new    # per-layer hidden trajectory
        return h_new

    lax.fori_loop(0, L, step, h0_ref[...],
                  unroll=True if L <= 32 else 4)


def stacked_hidden_state_fwd(x, hidden_stack, W, U, b):
    """Reproduces StackedHiddenState.forward with tanh-RNN layers.

    x: (B, L, D) (or unbatched / length-free variants per the module)
    hidden_stack: (B, depth, D) or (depth, D)
    W, U: (depth, D, D), b: (depth, D)
    Returns (x_out, hidden_out_stack) with hidden_out_stack (B, depth, L, D).
    """
    is_batch = hidden_stack.ndim == 3
    if not is_batch:
        x = x[None]
        hidden_stack = hidden_stack[None]
    is_len = x.ndim == 3
    if not is_len:
        x = x[:, None]

    B, L, D = x.shape
    depth = hidden_stack.shape[1]
    f32 = jnp.float32

    # (8, 128) alignment: pad batch to a sublane multiple, feature to a lane
    # multiple; batch is additionally split into tiles for the parallel axis.
    TB = min(_round_up(B, 8), 128)
    Bp = _round_up(B, TB)
    num_bt = Bp // TB
    Dp = _round_up(D, 128)

    xp = jnp.pad(x.astype(f32), ((0, Bp - B), (0, 0), (0, Dp - D)))
    h0p = jnp.pad(hidden_stack.astype(f32), ((0, Bp - B), (0, 0), (0, Dp - D)))
    Wp = jnp.pad(W.astype(f32), ((0, 0), (0, Dp - D), (0, Dp - D)))
    Up = jnp.pad(U.astype(f32), ((0, 0), (0, Dp - D), (0, Dp - D)))
    bp = jnp.pad(b.astype(f32), ((0, 0), (0, Dp - D))).reshape(depth, 1, Dp)

    # Kernel-internal layouts: time leading (cheap dynamic index), batch tile
    # and feature last (aligned (8,128) tiles).
    x_k = jnp.transpose(xp, (1, 0, 2)).reshape(L, num_bt, TB, Dp)
    x_k = jnp.transpose(x_k, (1, 0, 2, 3))                  # (num_bt, L, TB, Dp)
    h0_k = jnp.transpose(h0p, (1, 0, 2))                    # (depth, Bp, Dp)

    y_k, hid_k = pl.pallas_call(
        _stacked_rnn_kernel,
        out_shape=(
            jax.ShapeDtypeStruct((L, Bp, Dp), f32),
            jax.ShapeDtypeStruct((depth, L, Bp, Dp), f32),
        ),
        grid_spec=pltpu.PrefetchScalarGridSpec(
            num_scalar_prefetch=0,
            grid=(num_bt, depth),
            in_specs=[
                pl.BlockSpec(memory_space=pl.ANY),                        # x: raw HBM, DMA'd once per batch tile
                pl.BlockSpec((None, TB, Dp), lambda bt, i: (i, bt, 0)),   # h0 of layer i
                pl.BlockSpec((None, Dp, Dp), lambda bt, i: (i, 0, 0)),    # W_i
                pl.BlockSpec((None, Dp, Dp), lambda bt, i: (i, 0, 0)),    # U_i
                pl.BlockSpec((None, 1, Dp), lambda bt, i: (i, 0, 0)),     # b_i
            ],
            out_specs=(
                pl.BlockSpec((L, TB, Dp), lambda bt, i: (0, bt, 0)),          # resident layer output
                pl.BlockSpec((None, L, TB, Dp), lambda bt, i: (i, 0, bt, 0)),  # per-layer hidden traj
            ),
        ),
        compiler_params=pltpu.CompilerParams(
            dimension_semantics=("parallel", "arbitrary")),   # layers stay sequential
    )(x_k, h0_k, Wp, Up, bp)

    x_out = jnp.transpose(y_k[:, :B, :D], (1, 0, 2))             # (B, L, D)
    hid_out = jnp.transpose(hid_k[:, :, :B, :D], (2, 0, 1, 3))   # (B, depth, L, D)

    if not is_len:
        x_out = x_out[:, 0]
        hid_out = hid_out[:, :, 0]
    if not is_batch:
        x_out = x_out[0]
        hid_out = hid_out[0]
    return x_out, hid_out


def _ref_forward(x, hidden_stack, W, U, b):
    """Pure-JAX reference of the same stacked-RNN forward (PyTorch semantics)."""
    depth = hidden_stack.shape[1]
    hid_list = []
    for i in range(depth):
        def step(h, xt, i=i):
            h_new = jnp.tanh(xt @ W[i] + h @ U[i] + b[i])
            return h_new, h_new
        _, traj = lax.scan(step, hidden_stack[:, i, :], jnp.transpose(x, (1, 0, 2)))
        traj = jnp.transpose(traj, (1, 0, 2))   # (B, L, D)
        x = traj
        hid_list.append(traj)
    return x, jnp.stack(hid_list, axis=1)       # (B, L, D), (B, depth, L, D)


if __name__ == "__main__":
    B, L, D, depth = 2, 8, 32, 3
    key = jax.random.PRNGKey(0)
    k1, k2, k3, k4, k5 = jax.random.split(key, 5)

    x = jax.random.normal(k1, (B, L, D), jnp.float32)
    hidden_stack = jax.random.normal(k2, (B, depth, D), jnp.float32)
    # Deterministic parameter init (synthetic; shapes implied by the module).
    W = jax.random.normal(k3, (depth, D, D), jnp.float32) / jnp.sqrt(D)
    U = jax.random.normal(k4, (depth, D, D), jnp.float32) / jnp.sqrt(D)
    b = jax.random.normal(k5, (depth, D), jnp.float32) * 0.1

    y, hid = stacked_hidden_state_fwd(x, hidden_stack, W, U, b)
    jax.block_until_ready((y, hid))

    y_ref, hid_ref = _ref_forward(x, hidden_stack, W, U, b)
    assert y.shape == (B, L, D)
    assert hid.shape == (B, depth, L, D)
    assert jnp.allclose(y, y_ref, atol=1e-5, rtol=1e-5)
    assert jnp.allclose(hid, hid_ref, atol=1e-5, rtol=1e-5)

    print("KERNEL_OK")
</pallas_src>

<mosaic_0001>
module attributes {stable_mosaic.version = 11 : i64} {
  func.func @_stacked_rnn_kernel(%arg0: i32, %arg1: i32, %arg2: memref<1x8x8x128xf32, #tpu.memory_space<any>>, %arg3: memref<1x8x128xf32, #tpu.memory_space<vmem>>, %arg4: memref<1x128x128xf32, #tpu.memory_space<vmem>>, %arg5: memref<1x128x128xf32, #tpu.memory_space<vmem>>, %arg6: memref<1x1x128xf32, #tpu.memory_space<vmem>>, %arg7: memref<8x8x128xf32, #tpu.memory_space<vmem>>, %arg8: memref<1x8x8x128xf32, #tpu.memory_space<vmem>>) attributes {dimension_semantics = [#tpu.dimension_semantics<parallel>, #tpu.dimension_semantics<arbitrary>], iteration_bounds = array<i64: 1, 3>, scalar_prefetch = 0 : i64, scratch_operands = 0 : i64, tpu.core_type = #tpu.core_type<tc>, window_params = [{}, {transform_indices = @transform_1, window_bounds = array<i64: 1, 8, 128>}, {transform_indices = @transform_2, window_bounds = array<i64: 1, 128, 128>}, {transform_indices = @transform_3, window_bounds = array<i64: 1, 128, 128>}, {transform_indices = @transform_4, window_bounds = array<i64: 1, 1, 128>}, {transform_indices = @transform_5, window_bounds = array<i64: 8, 8, 128>}, {transform_indices = @transform_6, window_bounds = array<i64: 1, 8, 8, 128>}]} {
    %c0_i32 = arith.constant 0 : i32
    %0 = arith.cmpi eq, %arg1, %c0_i32 : i32
    %1 = arith.extui %0 : i1 to i32
    %c0_i32_0 = arith.constant 0 : i32
    %2 = arith.cmpi ne, %1, %c0_i32_0 : i32
    scf.if %2 {
      "tpu.region"() ({
        %130 = tpu.sem_alloc : memref<!tpu.dma_semaphore, #tpu.memory_space<semaphore_mem>>
        %c0_i32_83 = arith.constant 0 : i32
        %c0_i32_84 = arith.constant 0 : i32
        %c0_i32_85 = arith.constant 0 : i32
        %131 = tpu.memref_slice %arg2[%arg0, %c0_i32_83, %c0_i32_84, %c0_i32_85] : memref<1x8x8x128xf32, #tpu.memory_space<any>> -> memref<1x8x8x128xf32, #tpu.memory_space<any>>
        %132 = tpu.memref_squeeze %131 : memref<1x8x8x128xf32, #tpu.memory_space<any>> -> memref<8x8x128xf32, #tpu.memory_space<any>>
        tpu.enqueue_dma source(%132 : memref<8x8x128xf32, #tpu.memory_space<any>>) target(%arg7 : memref<8x8x128xf32, #tpu.memory_space<vmem>>) target_semaphore(%130 : memref<!tpu.dma_semaphore, #tpu.memory_space<semaphore_mem>>)
        %c0_i32_86 = arith.constant 0 : i32
        %c0_i32_87 = arith.constant 0 : i32
        %c0_i32_88 = arith.constant 0 : i32
        %133 = tpu.memref_slice %arg2[%arg0, %c0_i32_86, %c0_i32_87, %c0_i32_88] : memref<1x8x8x128xf32, #tpu.memory_space<any>> -> memref<1x8x8x128xf32, #tpu.memory_space<any>>
        %134 = tpu.memref_squeeze %133 : memref<1x8x8x128xf32, #tpu.memory_space<any>> -> memref<8x8x128xf32, #tpu.memory_space<any>>
        tpu.wait_dma2 semaphore(%130 : memref<!tpu.dma_semaphore, #tpu.memory_space<semaphore_mem>>) src(%134 : memref<8x8x128xf32, #tpu.memory_space<any>>) dst(%arg7 : memref<8x8x128xf32, #tpu.memory_space<vmem>>)
        tpu.yield
      }) : () -> ()
    } else {
    }
    %c0 = arith.constant 0 : index
    %c0_1 = arith.constant 0 : index
    %c0_2 = arith.constant 0 : index
    %3 = vector.load %arg4[%c0, %c0_1, %c0_2] : memref<1x128x128xf32, #tpu.memory_space<vmem>>, vector<1x128x128xf32>
    %4 = vector.shape_cast %3 : vector<1x128x128xf32> to vector<128x128xf32>
    %c0_3 = arith.constant 0 : index
    %c0_4 = arith.constant 0 : index
    %c0_5 = arith.constant 0 : index
    %5 = vector.load %arg5[%c0_3, %c0_4, %c0_5] : memref<1x128x128xf32, #tpu.memory_space<vmem>>, vector<1x128x128xf32>
    %6 = vector.shape_cast %5 : vector<1x128x128xf32> to vector<128x128xf32>
    %c0_6 = arith.constant 0 : index
    %c0_7 = arith.constant 0 : index
    %c0_8 = arith.constant 0 : index
    %7 = vector.load %arg6[%c0_6, %c0_7, %c0_8] : memref<1x1x128xf32, #tpu.memory_space<vmem>>, vector<1x1x128xf32>
    %8 = vector.shape_cast %7 : vector<1x1x128xf32> to vector<1x128xf32>
    %c0_9 = arith.constant 0 : index
    %c0_10 = arith.constant 0 : index
    %c0_11 = arith.constant 0 : index
    %9 = vector.load %arg7[%c0_9, %c0_10, %c0_11] : memref<8x8x128xf32, #tpu.memory_space<vmem>>, vector<8x8x128xf32>
    %10 = vector.shape_cast %9 : vector<8x8x128xf32> to vector<64x128xf32>
    %cst = arith.constant dense<0.000000e+00> : vector<64x128xf32>
    %11 = tpu.matmul %10, %4, %cst {dimension_numbers = #tpu.dot_dimension_numbers<[1], [0], [0], [1], [0, 0, 1, 1], [], []>} : vector<64x128xf32>, vector<128x128xf32>, vector<64x128xf32> -> vector<64x128xf32>
    %12 = vector.broadcast %8 : vector<1x128xf32> to vector<64x128xf32>
    %13 = arith.addf %11, %12 : vector<64x128xf32>
    %14 = vector.shape_cast %13 : vector<64x128xf32> to vector<8x8x128xf32>
    %c0_12 = arith.constant 0 : index
    %c0_13 = arith.constant 0 : index
    %c0_14 = arith.constant 0 : index
    %15 = vector.load %arg7[%c0_12, %c0_13, %c0_14] : memref<8x8x128xf32, #tpu.memory_space<vmem>>, vector<8x8x128xf32>
    tpu.vector_store %arg7[%c0_12, %c0_13, %c0_14], %14 {strides = array<i32>} : memref<8x8x128xf32, #tpu.memory_space<vmem>>, vector<8x8x128xf32>,
    %c0_15 = arith.constant 0 : index
    %c0_16 = arith.constant 0 : index
    %c0_17 = arith.constant 0 : index
    %16 = vector.load %arg3[%c0_15, %c0_16, %c0_17] : memref<1x8x128xf32, #tpu.memory_space<vmem>>, vector<1x8x128xf32>
    %17 = vector.shape_cast %16 : vector<1x8x128xf32> to vector<8x128xf32>
    %c0_i32_18 = arith.constant 0 : i32
    %18 = arith.index_cast %c0_i32_18 : i32 to index
    %c0_19 = arith.constant 0 : index
    %c0_20 = arith.constant 0 : index
    %19 = vector.load %arg7[%18, %c0_19, %c0_20] : memref<8x8x128xf32, #tpu.memory_space<vmem>>, vector<1x8x128xf32>
    %20 = vector.shape_cast %19 : vector<1x8x128xf32> to vector<8x128xf32>
    %cst_21 = arith.constant dense<0.000000e+00> : vector<8x128xf32>
    %21 = tpu.matmul %17, %6, %cst_21 {dimension_numbers = #tpu.dot_dimension_numbers<[1], [0], [0], [1], [0, 0, 1, 1], [], []>} : vector<8x128xf32>, vector<128x128xf32>, vector<8x128xf32> -> vector<8x128xf32>
    %22 = arith.addf %20, %21 : vector<8x128xf32>
    %23 = math.tanh %22 : vector<8x128xf32>
    %24 = arith.index_cast %c0_i32_18 : i32 to index
    %c0_22 = arith.constant 0 : index
    %c0_23 = arith.constant 0 : index
    %25 = vector.load %arg7[%24, %c0_22, %c0_23] : memref<8x8x128xf32, #tpu.memory_space<vmem>>, vector<1x8x128xf32>
    %26 = vector.shape_cast %25 : vector<1x8x128xf32> to vector<8x128xf32>
    %27 = vector.shape_cast %23 : vector<8x128xf32> to vector<1x8x128xf32>
    tpu.vector_store %arg7[%24, %c0_22, %c0_23], %27 {strides = array<i32>} : memref<8x8x128xf32, #tpu.memory_space<vmem>>, vector<1x8x128xf32>,
    %c0_24 = arith.constant 0 : index
    %28 = arith.index_cast %c0_i32_18 : i32 to index
    %c0_25 = arith.constant 0 : index
    %c0_26 = arith.constant 0 : index
    %29 = vector.load %arg8[%c0_24, %28, %c0_25, %c0_26] : memref<1x8x8x128xf32, #tpu.memory_space<vmem>>, vector<1x1x8x128xf32>
    %30 = vector.shape_cast %29 : vector<1x1x8x128xf32> to vector<8x128xf32>
    %31 = vector.shape_cast %23 : vector<8x128xf32> to vector<1x1x8x128xf32>
    tpu.vector_store %arg8[%c0_24, %28, %c0_25, %c0_26], %31 {strides = array<i32>} : memref<1x8x8x128xf32, #tpu.memory_space<vmem>>, vector<1x1x8x128xf32>,
    %c1_i32 = arith.constant 1 : i32
    %32 = arith.index_cast %c1_i32 : i32 to index
    %c0_27 = arith.constant 0 : index
    %c0_28 = arith.constant 0 : index
    %33 = vector.load %arg7[%32, %c0_27, %c0_28] : memref<8x8x128xf32, #tpu.memory_space<vmem>>, vector<1x8x128xf32>
    %34 = vector.shape_cast %33 : vector<1x8x128xf32> to vector<8x128xf32>
    %cst_29 = arith.constant dense<0.000000e+00> : vector<8x128xf32>
    %35 = tpu.matmul %23, %6, %cst_29 {dimension_numbers = #tpu.dot_dimension_numbers<[1], [0], [0], [1], [0, 0, 1, 1], [], []>} : vector<8x128xf32>, vector<128x128xf32>, vector<8x128xf32> -> vector<8x128xf32>
    %36 = arith.addf %34, %35 : vector<8x128xf32>
    %37 = math.tanh %36 : vector<8x128xf32>
    %38 = arith.index_cast %c1_i32 : i32 to index
    %c0_30 = arith.constant 0 : index
    %c0_31 = arith.constant 0 : index
    %39 = vector.load %arg7[%38, %c0_30, %c0_31] : memref<8x8x128xf32, #tpu.memory_space<vmem>>, vector<1x8x128xf32>
    %40 = vector.shape_cast %39 : vector<1x8x128xf32> to vector<8x128xf32>
    %41 = vector.shape_cast %37 : vector<8x128xf32> to vector<1x8x128xf32>
    tpu.vector_store %arg7[%38, %c0_30, %c0_31], %41 {strides = array<i32>} : memref<8x8x128xf32, #tpu.memory_space<vmem>>, vector<1x8x128xf32>,
    %c0_32 = arith.constant 0 : index
    %42 = arith.index_cast %c1_i32 : i32 to index
    %c0_33 = arith.constant 0 : index
    %c0_34 = arith.constant 0 : index
    %43 = vector.load %arg8[%c0_32, %42, %c0_33, %c0_34] : memref<1x8x8x128xf32, #tpu.memory_space<vmem>>, vector<1x1x8x128xf32>
    %44 = vector.shape_cast %43 : vector<1x1x8x128xf32> to vector<8x128xf32>
    %45 = vector.shape_cast %37 : vector<8x128xf32> to vector<1x1x8x128xf32>
    tpu.vector_store %arg8[%c0_32, %42, %c0_33, %c0_34], %45 {strides = array<i32>} : memref<1x8x8x128xf32, #tpu.memory_space<vmem>>, vector<1x1x8x128xf32>,
    %c2_i32 = arith.constant 2 : i32
    %46 = arith.index_cast %c2_i32 : i32 to index
    %c0_35 = arith.constant 0 : index
    %c0_36 = arith.constant 0 : index
    %47 = vector.load %arg7[%46, %c0_35, %c0_36] : memref<8x8x128xf32, #tpu.memory_space<vmem>>, vector<1x8x128xf32>
    %48 = vector.shape_cast %47 : vector<1x8x128xf32> to vector<8x128xf32>
    %cst_37 = arith.constant dense<0.000000e+00> : vector<8x128xf32>
    %49 = tpu.matmul %37, %6, %cst_37 {dimension_numbers = #tpu.dot_dimension_numbers<[1], [0], [0], [1], [0, 0, 1, 1], [], []>} : vector<8x128xf32>, vector<128x128xf32>, vector<8x128xf32> -> vector<8x128xf32>
    %50 = arith.addf %48, %49 : vector<8x128xf32>
    %51 = math.tanh %50 : vector<8x128xf32>
    %52 = arith.index_cast %c2_i32 : i32 to index
    %c0_38 = arith.constant 0 : index
    %c0_39 = arith.constant 0 : index
    %53 = vector.load %arg7[%52, %c0_38, %c0_39] : memref<8x8x128xf32, #tpu.memory_space<vmem>>, vector<1x8x128xf32>
    %54 = vector.shape_cast %53 : vector<1x8x128xf32> to vector<8x128xf32>
    %55 = vector.shape_cast %51 : vector<8x128xf32> to vector<1x8x128xf32>
    tpu.vector_store %arg7[%52, %c0_38, %c0_39], %55 {strides = array<i32>} : memref<8x8x128xf32, #tpu.memory_space<vmem>>, vector<1x8x128xf32>,
    %c0_40 = arith.constant 0 : index
    %56 = arith.index_cast %c2_i32 : i32 to index
    %c0_41 = arith.constant 0 : index
    %c0_42 = arith.constant 0 : index
    %57 = vector.load %arg8[%c0_40, %56, %c0_41, %c0_42] : memref<1x8x8x128xf32, #tpu.memory_space<vmem>>, vector<1x1x8x128xf32>
    %58 = vector.shape_cast %57 : vector<1x1x8x128xf32> to vector<8x128xf32>
    %59 = vector.shape_cast %51 : vector<8x128xf32> to vector<1x1x8x128xf32>
    tpu.vector_store %arg8[%c0_40, %56, %c0_41, %c0_42], %59 {strides = array<i32>} : memref<1x8x8x128xf32, #tpu.memory_space<vmem>>, vector<1x1x8x128xf32>,
    %c3_i32 = arith.constant 3 : i32
    %60 = arith.index_cast %c3_i32 : i32 to index
    %c0_43 = arith.constant 0 : index
    %c0_44 = arith.constant 0 : index
    %61 = vector.load %arg7[%60, %c0_43, %c0_44] : memref<8x8x128xf32, #tpu.memory_space<vmem>>, vector<1x8x128xf32>
    %62 = vector.shape_cast %61 : vector<1x8x128xf32> to vector<8x128xf32>
    %cst_45 = arith.constant dense<0.000000e+00> : vector<8x128xf32>
    %63 = tpu.matmul %51, %6, %cst_45 {dimension_numbers = #tpu.dot_dimension_numbers<[1], [0], [0], [1], [0, 0, 1, 1], [], []>} : vector<8x128xf32>, vector<128x128xf32>, vector<8x128xf32> -> vector<8x128xf32>
    %64 = arith.addf %62, %63 : vector<8x128xf32>
    %65 = math.tanh %64 : vector<8x128xf32>
    %66 = arith.index_cast %c3_i32 : i32 to index
    %c0_46 = arith.constant 0 : index
    %c0_47 = arith.constant 0 : index
    %67 = vector.load %arg7[%66, %c0_46, %c0_47] : memref<8x8x128xf32, #tpu.memory_space<vmem>>, vector<1x8x128xf32>
    %68 = vector.shape_cast %67 : vector<1x8x128xf32> to vector<8x128xf32>
    %69 = vector.shape_cast %65 : vector<8x128xf32> to vector<1x8x128xf32>
    tpu.vector_store %arg7[%66, %c0_46, %c0_47], %69 {strides = array<i32>} : memref<8x8x128xf32, #tpu.memory_space<vmem>>, vector<1x8x128xf32>,
    %c0_48 = arith.constant 0 : index
    %70 = arith.index_cast %c3_i32 : i32 to index
    %c0_49 = arith.constant 0 : index
    %c0_50 = arith.constant 0 : index
    %71 = vector.load %arg8[%c0_48, %70, %c0_49, %c0_50] : memref<1x8x8x128xf32, #tpu.memory_space<vmem>>, vector<1x1x8x128xf32>
    %72 = vector.shape_cast %71 : vector<1x1x8x128xf32> to vector<8x128xf32>
    %73 = vector.shape_cast %65 : vector<8x128xf32> to vector<1x1x8x128xf32>
    tpu.vector_store %arg8[%c0_48, %70, %c0_49, %c0_50], %73 {strides = array<i32>} : memref<1x8x8x128xf32, #tpu.memory_space<vmem>>, vector<1x1x8x128xf32>,
    %c4_i32 = arith.constant 4 : i32
    %74 = arith.index_cast %c4_i32 : i32 to index
    %c0_51 = arith.constant 0 : index
    %c0_52 = arith.constant 0 : index
    %75 = vector.load %arg7[%74, %c0_51, %c0_52] : memref<8x8x128xf32, #tpu.memory_space<vmem>>, vector<1x8x128xf32>
    %76 = vector.shape_cast %75 : vector<1x8x128xf32> to vector<8x128xf32>
    %cst_53 = arith.constant dense<0.000000e+00> : vector<8x128xf32>
    %77 = tpu.matmul %65, %6, %cst_53 {dimension_numbers = #tpu.dot_dimension_numbers<[1], [0], [0], [1], [0, 0, 1, 1], [], []>} : vector<8x128xf32>, vector<128x128xf32>, vector<8x128xf32> -> vector<8x128xf32>
    %78 = arith.addf %76, %77 : vector<8x128xf32>
    %79 = math.tanh %78 : vector<8x128xf32>
    %80 = arith.index_cast %c4_i32 : i32 to index
    %c0_54 = arith.constant 0 : index
    %c0_55 = arith.constant 0 : index
    %81 = vector.load %arg7[%80, %c0_54, %c0_55] : memref<8x8x128xf32, #tpu.memory_space<vmem>>, vector<1x8x128xf32>
    %82 = vector.shape_cast %81 : vector<1x8x128xf32> to vector<8x128xf32>
    %83 = vector.shape_cast %79 : vector<8x128xf32> to vector<1x8x128xf32>
    tpu.vector_store %arg7[%80, %c0_54, %c0_55], %83 {strides = array<i32>} : memref<8x8x128xf32, #tpu.memory_space<vmem>>, vector<1x8x128xf32>,
    %c0_56 = arith.constant 0 : index
    %84 = arith.index_cast %c4_i32 : i32 to index
    %c0_57 = arith.constant 0 : index
    %c0_58 = arith.constant 0 : index
    %85 = vector.load %arg8[%c0_56, %84, %c0_57, %c0_58] : memref<1x8x8x128xf32, #tpu.memory_space<vmem>>, vector<1x1x8x128xf32>
    %86 = vector.shape_cast %85 : vector<1x1x8x128xf32> to vector<8x128xf32>
    %87 = vector.shape_cast %79 : vector<8x128xf32> to vector<1x1x8x128xf32>
    tpu.vector_store %arg8[%c0_56, %84, %c0_57, %c0_58], %87 {strides = array<i32>} : memref<1x8x8x128xf32, #tpu.memory_space<vmem>>, vector<1x1x8x128xf32>,
    %c5_i32 = arith.constant 5 : i32
    %88 = arith.index_cast %c5_i32 : i32 to index
    %c0_59 = arith.constant 0 : index
    %c0_60 = arith.constant 0 : index
    %89 = vector.load %arg7[%88, %c0_59, %c0_60] : memref<8x8x128xf32, #tpu.memory_space<vmem>>, vector<1x8x128xf32>
    %90 = vector.shape_cast %89 : vector<1x8x128xf32> to vector<8x128xf32>
    %cst_61 = arith.constant dense<0.000000e+00> : vector<8x128xf32>
    %91 = tpu.matmul %79, %6, %cst_61 {dimension_numbers = #tpu.dot_dimension_numbers<[1], [0], [0], [1], [0, 0, 1, 1], [], []>} : vector<8x128xf32>, vector<128x128xf32>, vector<8x128xf32> -> vector<8x128xf32>
    %92 = arith.addf %90, %91 : vector<8x128xf32>
    %93 = math.tanh %92 : vector<8x128xf32>
    %94 = arith.index_cast %c5_i32 : i32 to index
    %c0_62 = arith.constant 0 : index
    %c0_63 = arith.constant 0 : index
    %95 = vector.load %arg7[%94, %c0_62, %c0_63] : memref<8x8x128xf32, #tpu.memory_space<vmem>>, vector<1x8x128xf32>
    %96 = vector.shape_cast %95 : vector<1x8x128xf32> to vector<8x128xf32>
    %97 = vector.shape_cast %93 : vector<8x128xf32> to vector<1x8x128xf32>
    tpu.vector_store %arg7[%94, %c0_62, %c0_63], %97 {strides = array<i32>} : memref<8x8x128xf32, #tpu.memory_space<vmem>>, vector<1x8x128xf32>,
    %c0_64 = arith.constant 0 : index
    %98 = arith.index_cast %c5_i32 : i32 to index
    %c0_65 = arith.constant 0 : index
    %c0_66 = arith.constant 0 : index
    %99 = vector.load %arg8[%c0_64, %98, %c0_65, %c0_66] : memref<1x8x8x128xf32, #tpu.memory_space<vmem>>, vector<1x1x8x128xf32>
    %100 = vector.shape_cast %99 : vector<1x1x8x128xf32> to vector<8x128xf32>
    %101 = vector.shape_cast %93 : vector<8x128xf32> to vector<1x1x8x128xf32>
    tpu.vector_store %arg8[%c0_64, %98, %c0_65, %c0_66], %101 {strides = array<i32>} : memref<1x8x8x128xf32, #tpu.memory_space<vmem>>, vector<1x1x8x128xf32>,
    %c6_i32 = arith.constant 6 : i32
    %102 = arith.index_cast %c6_i32 : i32 to index
    %c0_67 = arith.constant 0 : index
    %c0_68 = arith.constant 0 : index
    %103 = vector.load %arg7[%102, %c0_67, %c0_68] : memref<8x8x128xf32, #tpu.memory_space<vmem>>, vector<1x8x128xf32>
    %104 = vector.shape_cast %103 : vector<1x8x128xf32> to vector<8x128xf32>
    %cst_69 = arith.constant dense<0.000000e+00> : vector<8x128xf32>
    %105 = tpu.matmul %93, %6, %cst_69 {dimension_numbers = #tpu.dot_dimension_numbers<[1], [0], [0], [1], [0, 0, 1, 1], [], []>} : vector<8x128xf32>, vector<128x128xf32>, vector<8x128xf32> -> vector<8x128xf32>
    %106 = arith.addf %104, %105 : vector<8x128xf32>
    %107 = math.tanh %106 : vector<8x128xf32>
    %108 = arith.index_cast %c6_i32 : i32 to index
    %c0_70 = arith.constant 0 : index
    %c0_71 = arith.constant 0 : index
    %109 = vector.load %arg7[%108, %c0_70, %c0_71] : memref<8x8x128xf32, #tpu.memory_space<vmem>>, vector<1x8x128xf32>
    %110 = vector.shape_cast %109 : vector<1x8x128xf32> to vector<8x128xf32>
    %111 = vector.shape_cast %107 : vector<8x128xf32> to vector<1x8x128xf32>
    tpu.vector_store %arg7[%108, %c0_70, %c0_71], %111 {strides = array<i32>} : memref<8x8x128xf32, #tpu.memory_space<vmem>>, vector<1x8x128xf32>,
    %c0_72 = arith.constant 0 : index
    %112 = arith.index_cast %c6_i32 : i32 to index
    %c0_73 = arith.constant 0 : index
    %c0_74 = arith.constant 0 : index
    %113 = vector.load %arg8[%c0_72, %112, %c0_73, %c0_74] : memref<1x8x8x128xf32, #tpu.memory_space<vmem>>, vector<1x1x8x128xf32>
    %114 = vector.shape_cast %113 : vector<1x1x8x128xf32> to vector<8x128xf32>
    %115 = vector.shape_cast %107 : vector<8x128xf32> to vector<1x1x8x128xf32>
    tpu.vector_store %arg8[%c0_72, %112, %c0_73, %c0_74], %115 {strides = array<i32>} : memref<1x8x8x128xf32, #tpu.memory_space<vmem>>, vector<1x1x8x128xf32>,
    %c7_i32 = arith.constant 7 : i32
    %116 = arith.index_cast %c7_i32 : i32 to index
    %c0_75 = arith.constant 0 : index
    %c0_76 = arith.constant 0 : index
    %117 = vector.load %arg7[%116, %c0_75, %c0_76] : memref<8x8x128xf32, #tpu.memory_space<vmem>>, vector<1x8x128xf32>
    %118 = vector.shape_cast %117 : vector<1x8x128xf32> to vector<8x128xf32>
    %cst_77 = arith.constant dense<0.000000e+00> : vector<8x128xf32>
    %119 = tpu.matmul %107, %6, %cst_77 {dimension_numbers = #tpu.dot_dimension_numbers<[1], [0], [0], [1], [0, 0, 1, 1], [], []>} : vector<8x128xf32>, vector<128x128xf32>, vector<8x128xf32> -> vector<8x128xf32>
    %120 = arith.addf %118, %119 : vector<8x128xf32>
    %121 = math.tanh %120 : vector<8x128xf32>
    %122 = arith.index_cast %c7_i32 : i32 to index
    %c0_78 = arith.constant 0 : index
    %c0_79 = arith.constant 0 : index
    %123 = vector.load %arg7[%122, %c0_78, %c0_79] : memref<8x8x128xf32, #tpu.memory_space<vmem>>, vector<1x8x128xf32>
    %124 = vector.shape_cast %123 : vector<1x8x128xf32> to vector<8x128xf32>
    %125 = vector.shape_cast %121 : vector<8x128xf32> to vector<1x8x128xf32>
    tpu.vector_store %arg7[%122, %c0_78, %c0_79], %125 {strides = array<i32>} : memref<8x8x128xf32, #tpu.memory_space<vmem>>, vector<1x8x128xf32>,
    %c0_80 = arith.constant 0 : index
    %126 = arith.index_cast %c7_i32 : i32 to index
    %c0_81 = arith.constant 0 : index
    %c0_82 = arith.constant 0 : index
    %127 = vector.load %arg8[%c0_80, %126, %c0_81, %c0_82] : memref<1x8x8x128xf32, #tpu.memory_space<vmem>>, vector<1x1x8x128xf32>
    %128 = vector.shape_cast %127 : vector<1x1x8x128xf32> to vector<8x128xf32>
    %129 = vector.shape_cast %121 : vector<8x128xf32> to vector<1x1x8x128xf32>
    tpu.vector_store %arg8[%c0_80, %126, %c0_81, %c0_82], %129 {strides = array<i32>} : memref<1x8x8x128xf32, #tpu.memory_space<vmem>>, vector<1x1x8x128xf32>,
    %c8_i32 = arith.constant 8 : i32
    return
  }
  func.func @transform_1(%arg0: i32, %arg1: i32) -> (i32, i32, i32) {
    %c0_i32 = arith.constant 0 : i32
    %c0_i32_0 = arith.constant 0 : i32
    return %arg1, %arg0, %c0_i32 : i32, i32, i32
  }
  func.func @transform_2(%arg0: i32, %arg1: i32) -> (i32, i32, i32) {
    %c0_i32 = arith.constant 0 : i32
    %c0_i32_0 = arith.constant 0 : i32
    %c0_i32_1 = arith.constant 0 : i32
    return %arg1, %c0_i32, %c0_i32_0 : i32, i32, i32
  }
  func.func @transform_3(%arg0: i32, %arg1: i32) -> (i32, i32, i32) {
    %c0_i32 = arith.constant 0 : i32
    %c0_i32_0 = arith.constant 0 : i32
    %c0_i32_1 = arith.constant 0 : i32
    return %arg1, %c0_i32, %c0_i32_0 : i32, i32, i32
  }
  func.func @transform_4(%arg0: i32, %arg1: i32) -> (i32, i32, i32) {
    %c0_i32 = arith.constant 0 : i32
    %c0_i32_0 = arith.constant 0 : i32
    %c0_i32_1 = arith.constant 0 : i32
    return %arg1, %c0_i32, %c0_i32_0 : i32, i32, i32
  }
  func.func @transform_5(%arg0: i32, %arg1: i32) -> (i32, i32, i32) {
    %c0_i32 = arith.constant 0 : i32
    %c0_i32_0 = arith.constant 0 : i32
    %c0_i32_1 = arith.constant 0 : i32
    return %c0_i32, %arg0, %c0_i32_0 : i32, i32, i32
  }
  func.func @transform_6(%arg0: i32, %arg1: i32) -> (i32, i32, i32, i32) {
    %c0_i32 = arith.constant 0 : i32
    %c0_i32_0 = arith.constant 0 : i32
    %c0_i32_1 = arith.constant 0 : i32
    return %arg1, %c0_i32, %arg0, %c0_i32_0 : i32, i32, i32, i32
  }
}

</mosaic_0001>

<llo_original>
// kernel: tpu_custom_call.1
$region0: #{tpu_custom_call.1}
  #allocation0 [shape = 'u32[]', space=smem, size = 0x4, offset = 0x4, fixed_abs, tag = 'smem constant byte address 0x4 - core index']
  #allocation1 [shape = 'u32[144,128]{1,0:T(1,128)}', space=vmem, size = 0x12000, scoped, tag = 'internal scratch']
  #allocation12 [shape = 's32[]', space=sflag, size = 0x4, offset = 0, fixed_abs, tag = 'sflag constant byte address 0x0 - dummy sync flag']
  #allocation13 [shape = 's32[]', space=sflag, size = 0x4, offset = 0, fixed_abs, tag = 'sflag constant byte address 0x0 - dummy sync flag']
  #allocation14 [shape = 'u32[]', space=smem, size = 0x4, offset = 0x44, fixed_abs, tag = 'smem constant byte address 0x44 - assertion arg 0']
  #allocation15 [shape = 'u32[]', space=smem, size = 0x4, offset = 0x48, fixed_abs, tag = 'smem constant byte address 0x48 - assertion arg 1']
  %s0 = inlined_call_operand.hbm [shape: f32[1,8,8,128], index: 0, kind: input, shape index: {}]
  %s1 = inlined_call_operand.hbm [shape: f32[3,8,128], index: 1, kind: input, shape index: {}]
  %s2 = inlined_call_operand.hbm [shape: f32[3,128,128], index: 2, kind: input, shape index: {}]
  %s3 = inlined_call_operand.hbm [shape: f32[3,128,128], index: 3, kind: input, shape index: {}]
  %s4 = inlined_call_operand.vmem [shape: f32[3,1,128], index: 4, kind: input, shape index: {}]
  %s5 = inlined_call_operand.hbm [shape: f32[8,8,128], index: 5, kind: output, shape index: {0}]
  %s6 = inlined_call_operand.hbm [shape: f32[3,8,8,128], index: 6, kind: output, shape index: {1}]
  %7 = xla_tuple %s5, %s6
  %s8 = sld [smem:[#allocation0]]
  $region78: #{tpu_custom_call.1} parent=0
    _
  %s10 = ssub.s32 1, %s8
  %s11 = scalar_select 0, %s10, %s8
  $region1: #{tpu_custom_call.1} parent=0
    #allocation2 [shape = 'u8[8192]{0}', space=vmem, size = 0x2000, scoped, tag = 'input window, operand 1']
    #allocation3 [shape = 's32[2]{0}', space=sflag, size = 0x8, scoped, tag = 'scoped memory for tpu_custom_call.1']
    #allocation4 [shape = 's32[2]{0}', space=sflag, size = 0x8, scoped, tag = 'scoped memory for tpu_custom_call.1']
    #allocation5 [shape = 'u8[131072]{0}', space=vmem, size = 0x20000, scoped, tag = 'input window, operand 2']
    #allocation6 [shape = 's32[2]{0}', space=sflag, size = 0x8, scoped, tag = 'scoped memory for tpu_custom_call.1']
    #allocation7 [shape = 'u8[131072]{0}', space=vmem, size = 0x20000, scoped, tag = 'input window, operand 3']
    #allocation8 [shape = 'u8[32768]{0}', space=vmem, size = 0x8000, scoped, tag = 'output window, operand 0, single buffered']
    #allocation9 [shape = 'u8[65536]{0}', space=vmem, size = 0x10000, scoped, tag = 'output window, operand 1']
    #allocation10 [shape = 's32[2]{0}', space=sflag, size = 0x8, scoped, tag = 'scoped memory for tpu_custom_call.1']
    %12 = vsyncpa [#allocation3], 0
    %s13 = scalar_lea.sflag [#allocation3], 1
    %14 = vsyncpa %s13, 0
    %15 = vsyncpa [#allocation6], 0
    %s16 = scalar_lea.sflag [#allocation6], 1
    %17 = vsyncpa %s16, 0
    %18 = vsyncpa [#allocation4], 0
    %19 = vsyncpa [#allocation10], 0
    %s20 = scalar_lea.sflag [#allocation10], 1
    %21 = vsyncpa %s20, 0
    loop: start=0, step=1, limit=5
    $region2: #{tpu_custom_call.1} parent=1 // loop_pre_header
      _
    $region3: #{tpu_custom_call.1} parent=1 // loop_header
      %s23 = sphi 0, %s27
      %p24 = scmp.ge.s32.totalorder %s23, 5
      %s30 = sphi 0, %s42
      %s31 = sphi 0, %s38
      %s32 = sphi 0, %s30
      %s33 = sphi 0, %s31
      %s34 = sphi 0, %s32
      %s35 = sphi 0, %s33
      %s47 = sphi 0, %s49
      %s50 = sphi 0, %s47
      %s51 = sphi 0, %s50
      %s67 = sphi 0, %s51
      %s73 = sphi 0, %s75
      %s76 = sphi 0, %s73
      %s77 = sphi 0, %s76
      %s93 = sphi 0, %s77
      %s99 = sphi 0, %s101
      %s102 = sphi 0, %s99
      %s103 = sphi 0, %s102
      %s119 = sphi 0, %s103
      %s125 = sphi 0, %s127
      %s128 = sphi 0, %s125
      %s129 = sphi 0, %s128
      %s145 = sphi 0, %s129
      %s151 = sphi 0, %s153
      %s154 = sphi 0, %s151
      %s155 = sphi 0, %s154
      %s171 = sphi 0, %s155
      %s179 = sphi 0, %s181
      %s182 = sphi 0, %s179
      %s183 = sphi 0, %s182
      %s199 = sphi 0, %s183
    $region4: #{tpu_custom_call.1} parent=1 // loop_header_branch
      %26 = sbr.rel (%p24) target = $region8
    $region5: #{tpu_custom_call.1} parent=1 // loop_body
      %s28 = ssub.s32 %s23, 1
      %s29 = ssub.s32 %s23, 2
      %s36 = sadd.s32 1, %s31
      %p37 = scmp.ge.s32.totalorder %s36, 3
      %s38 = scalar_select %p37, 0, %s36
      %s39 = sadd.s32 1, %s30
      %s40 = scalar_select %p37, %s39, %s30
      %p41 = scmp.ge.s32.totalorder %s40, 1
      %s42 = scalar_select %p41, 0, %s40
      %s43 = ssub.s32 %s31, %s38
      %s44 = ssub.s32 %s30, %s42
      %s45 = sor.u32 %s43, %s44
      %p46 = scmp.eq.s32.totalorder %s45, 0
      %s48 = sadd.s32 %s47, 1
      %s49 = scalar_select %p46, %s47, %s48
      %p52 = pneg %p46
      %p53 = scmp.eq.s32.totalorder %s23, 2
      %p54 = por %p52, %p53
      %p55 = scmp.ne.s32.totalorder %s47, %s50
      %p56 = scmp.eq.s32.totalorder %s23, 0
      %p57 = por %p55, %p56
      %p58 = scmp.ne.s32.totalorder %s47, %s50
      %p59 = scmp.eq.s32.totalorder %s28, 2
      %p60 = por %p58, %p59
      %p61 = scmp.ne.s32.totalorder %s50, %s51
      %p62 = scmp.eq.s32.totalorder %s28, 0
      %p63 = por %p61, %p62
      %p64 = scmp.ne.s32.totalorder %s50, %s51
      %p65 = scmp.eq.s32.totalorder %s29, 2
      %p66 = por %p64, %p65
      %p68 = scmp.ne.s32.totalorder %s51, %s67
      %p69 = scmp.eq.s32.totalorder %s29, 0
      %p70 = por %p68, %p69
      %s71 = ssub.s32 %s31, %s38
      %p72 = scmp.eq.s32.totalorder %s71, 0
      %s74 = sadd.s32 %s73, 1
      %s75 = scalar_select %p72, %s73, %s74
      %p78 = pneg %p72
      %p79 = scmp.eq.s32.totalorder %s23, 2
      %p80 = por %p78, %p79
      %p81 = scmp.ne.s32.totalorder %s73, %s76
      %p82 = scmp.eq.s32.totalorder %s23, 0
      %p83 = por %p81, %p82
      %p84 = scmp.ne.s32.totalorder %s73, %s76
      %p85 = scmp.eq.s32.totalorder %s28, 2
      %p86 = por %p84, %p85
      %p87 = scmp.ne.s32.totalorder %s76, %s77
      %p88 = scmp.eq.s32.totalorder %s28, 0
      %p89 = por %p87, %p88
      %p90 = scmp.ne.s32.totalorder %s76, %s77
      %p91 = scmp.eq.s32.totalorder %s29, 2
      %p92 = por %p90, %p91
      %p94 = scmp.ne.s32.totalorder %s77, %s93
      %p95 = scmp.eq.s32.totalorder %s29, 0
      %p96 = por %p94, %p95
      %s97 = ssub.s32 %s31, %s38
      %p98 = scmp.eq.s32.totalorder %s97, 0
      %s100 = sadd.s32 %s99, 1
      %s101 = scalar_select %p98, %s99, %s100
      %p104 = pneg %p98
      %p105 = scmp.eq.s32.totalorder %s23, 2
      %p106 = por %p104, %p105
      %p107 = scmp.ne.s32.totalorder %s99, %s102
      %p108 = scmp.eq.s32.totalorder %s23, 0
      %p109 = por %p107, %p108
      %p110 = scmp.ne.s32.totalorder %s99, %s102
      %p111 = scmp.eq.s32.totalorder %s28, 2
      %p112 = por %p110, %p111
      %p113 = scmp.ne.s32.totalorder %s102, %s103
      %p114 = scmp.eq.s32.totalorder %s28, 0
      %p115 = por %p113, %p114
      %p116 = scmp.ne.s32.totalorder %s102, %s103
      %p117 = scmp.eq.s32.totalorder %s29, 2
      %p118 = por %p116, %p117
      %p120 = scmp.ne.s32.totalorder %s103, %s119
      %p121 = scmp.eq.s32.totalorder %s29, 0
      %p122 = por %p120, %p121
      %s123 = ssub.s32 %s31, %s38
      %p124 = scmp.eq.s32.totalorder %s123, 0
      %s126 = sadd.s32 %s125, 1
      %s127 = scalar_select %p124, %s125, %s126
      %p130 = pneg %p124
      %p131 = scmp.eq.s32.totalorder %s23, 2
      %p132 = por %p130, %p131
      %p133 = scmp.ne.s32.totalorder %s125, %s128
      %p134 = scmp.eq.s32.totalorder %s23, 0
      %p135 = por %p133, %p134
      %p136 = scmp.ne.s32.totalorder %s125, %s128
      %p137 = scmp.eq.s32.totalorder %s28, 2
      %p138 = por %p136, %p137
      %p139 = scmp.ne.s32.totalorder %s128, %s129
      %p140 = scmp.eq.s32.totalorder %s28, 0
      %p141 = por %p139, %p140
      %p142 = scmp.ne.s32.totalorder %s128, %s129
      %p143 = scmp.eq.s32.totalorder %s29, 2
      %p144 = por %p142, %p143
      %p146 = scmp.ne.s32.totalorder %s129, %s145
      %p147 = scmp.eq.s32.totalorder %s29, 0
      %p148 = por %p146, %p147
      %s149 = ssub.s32 %s30, %s42
      %p150 = scmp.eq.s32.totalorder %s149, 0
      %s152 = sadd.s32 %s151, 1
      %s153 = scalar_select %p150, %s151, %s152
      %p156 = pneg %p150
      %p157 = scmp.eq.s32.totalorder %s23, 2
      %p158 = por %p156, %p157
      %p159 = scmp.ne.s32.totalorder %s151, %s154
      %p160 = scmp.eq.s32.totalorder %s23, 0
      %p161 = por %p159, %p160
      %p162 = scmp.ne.s32.totalorder %s151, %s154
      %p163 = scmp.eq.s32.totalorder %s28, 2
      %p164 = por %p162, %p163
      %p165 = scmp.ne.s32.totalorder %s154, %s155
      %p166 = scmp.eq.s32.totalorder %s28, 0
      %p167 = por %p165, %p166
      %p168 = scmp.ne.s32.totalorder %s154, %s155
      %p169 = scmp.eq.s32.totalorder %s29, 2
      %p170 = por %p168, %p169
      %p172 = scmp.ne.s32.totalorder %s155, %s171
      %p173 = scmp.eq.s32.totalorder %s29, 0
      %p174 = por %p172, %p173
      %s175 = ssub.s32 %s31, %s38
      %s176 = ssub.s32 %s30, %s42
      %s177 = sor.u32 %s175, %s176
      %p178 = scmp.eq.s32.totalorder %s177, 0
      %s180 = sadd.s32 %s179, 1
      %s181 = scalar_select %p178, %s179, %s180
      %p184 = pneg %p178
      %p185 = scmp.eq.s32.totalorder %s23, 2
      %p186 = por %p184, %p185
      %p187 = scmp.ne.s32.totalorder %s179, %s182
      %p188 = scmp.eq.s32.totalorder %s23, 0
      %p189 = por %p187, %p188
      %p190 = scmp.ne.s32.totalorder %s179, %s182
      %p191 = scmp.eq.s32.totalorder %s28, 2
      %p192 = por %p190, %p191
      %p193 = scmp.ne.s32.totalorder %s182, %s183
      %p194 = scmp.eq.s32.totalorder %s28, 0
      %p195 = por %p193, %p194
      %p196 = scmp.ne.s32.totalorder %s182, %s183
      %p197 = scmp.eq.s32.totalorder %s29, 2
      %p198 = por %p196, %p197
      %p200 = scmp.ne.s32.totalorder %s183, %s199
      %p201 = scmp.eq.s32.totalorder %s29, 0
      %p202 = por %p200, %p201
      %p203 = scmp.le.s32.totalorder 1, %s23
      %p204 = scmp.lt.s32.totalorder %s23, 4
      %p205 = pnand %p203, %p204
      %p206 = pneg %p205
      // Predicated region
      $region9: #{tpu_custom_call.1} parent=5 // pred_check
        _
      $region10: #{tpu_custom_call.1} parent=5 // pred_check_branch
        %208 = sbr.rel (%p205) target = $region12
      $region11: #{tpu_custom_call.1} parent=5 // pred_region
        %s209 = ssub.s32 %s23, 1
      $region12: #{tpu_custom_call.1} parent=5 // pred_fallthru
        _
      %p210 = scmp.lt.s32.totalorder %s23, 3
      // Predicated region
      $region13: #{tpu_custom_call.1} parent=5 // pred_check
        %p211 = pneg %p210
      $region14: #{tpu_custom_call.1} parent=5 // pred_check_branch
        %213 = sbr.rel (%p211) target = $region16
      $region15: #{tpu_custom_call.1} parent=5 // pred_region
        // Predicated region
        $region17: #{tpu_custom_call.1} parent=15 // pred_check
          %p214 = pneg %p57
        $region18: #{tpu_custom_call.1} parent=15 // pred_check_branch
          %216 = sbr.rel (%p214) target = $region20
        $region19: #{tpu_custom_call.1} parent=15 // pred_region
          %s217 = sand.u32 %s47, 1
          %s218 = scalar_lea.sflag [#allocation3], %s217
          %s219 = sand.u32 %s47, 1
          %s220 = smul.addr %s219, 8
          %s221 = scalar_lea.vmem [#allocation2], %s220
          %s223 = ssub.s32 128, 128
          %224 = vsyncadd %s218, %s223
          %s225 = sadd.s32 %s30, %s31
          %s226 = smul.addr %s225, 128
          %s227 = scalar_lea.hbm %s1, %s226
          %s229 = sshll.u32 %s221, 4
          %s230 = int_to_ptr.vmem [resolvable:$true] %s229
          %232 = dma.hbm_to_vmem [thread:$0]  %s227, 128, %s230, %s218
        $region20: #{tpu_custom_call.1} parent=15 // pred_fallthru
          _
        // Predicated region
        $region21: #{tpu_custom_call.1} parent=15 // pred_check
          %p233 = pneg %p83
        $region22: #{tpu_custom_call.1} parent=15 // pred_check_branch
          %235 = sbr.rel (%p233) target = $region24
        $region23: #{tpu_custom_call.1} parent=15 // pred_region
          %s236 = sand.u32 %s23, 1
          %s237 = scalar_lea.sflag [#allocation6], %s236
          %s238 = sand.u32 %s73, 1
          %s239 = smul.addr %s238, 128
          %s240 = scalar_lea.vmem [#allocation5], %s239
          %s242 = ssub.s32 2048, 2048
          %243 = vsyncadd %s237, %s242
          %s244 = smul.addr %s31, 16
          %s245 = smul.addr %s244, 128
          %s246 = scalar_lea.hbm %s2, %s245
          %s247 = sshll.u32 %s240, 4
          %s248 = int_to_ptr.vmem [resolvable:$true] %s247
          %253 = dma.hbm_to_vmem [thread:$0]  %s246, 2048, %s248, %s237, 128, 128, 8
        $region24: #{tpu_custom_call.1} parent=15 // pred_fallthru
          _
        // Predicated region
        $region25: #{tpu_custom_call.1} parent=15 // pred_check
          %p254 = pneg %p109
        $region26: #{tpu_custom_call.1} parent=15 // pred_check_branch
          %256 = sbr.rel (%p254) target = $region28
        $region27: #{tpu_custom_call.1} parent=15 // pred_region
          %s257 = sand.u32 %s23, 1
          %s258 = scalar_lea.sflag [#allocation6], %s257
          %s259 = sand.u32 %s99, 1
          %s260 = smul.addr %s259, 128
          %s261 = scalar_lea.vmem [#allocation7], %s260
          %s263 = ssub.s32 2048, 2048
          %264 = vsyncadd %s258, %s263
          %s265 = smul.addr %s31, 16
          %s266 = smul.addr %s265, 128
          %s267 = scalar_lea.hbm %s3, %s266
          %s268 = sshll.u32 %s261, 4
          %s269 = int_to_ptr.vmem [resolvable:$true] %s268
          %274 = dma.hbm_to_vmem [thread:$0]  %s267, 2048, %s269, %s258, 128, 128, 8
        $region28: #{tpu_custom_call.1} parent=15 // pred_fallthru
          _
        // Predicated region
        $region29: #{tpu_custom_call.1} parent=15 // pred_check
          %p275 = pneg %p135
        $region30: #{tpu_custom_call.1} parent=15 // pred_check_branch
          %277 = sbr.rel (%p275) target = $region32
        $region31: #{tpu_custom_call.1} parent=15 // pred_region
          %p278 = scmp.lt.s32.totalorder %s31, 2
          %s279 = scalar_select %p278, %s31, 2
          %s280 = scalar_lea.vmem %s4, %s279
        $region32: #{tpu_custom_call.1} parent=15 // pred_fallthru
          _
      $region16: #{tpu_custom_call.1} parent=5 // pred_fallthru
        _
      %p281 = scmp.le.s32.totalorder 1, %s23
      %p282 = scmp.lt.s32.totalorder %s23, 4
      %p283 = pnand %p281, %p282
      %p284 = pneg %p283
      // Predicated region
      $region33: #{tpu_custom_call.1} parent=5 // pred_check
        _
      $region34: #{tpu_custom_call.1} parent=5 // pred_check_branch
        %286 = sbr.rel (%p283) target = $region36
      $region35: #{tpu_custom_call.1} parent=5 // pred_region
        %s287 = ssub.s32 %s23, 1
        %s288 = sand.u32 %s50, 1
        %s289 = scalar_lea.sflag [#allocation3], %s288
        %s290 = sand.u32 %s50, 1
        %s291 = smul.addr %s290, 8
        %s292 = scalar_lea.vmem [#allocation2], %s291
        // Predicated region
        $region37: #{tpu_custom_call.1} parent=35 // pred_check
          %p293 = pneg %p63
        $region38: #{tpu_custom_call.1} parent=35 // pred_check_branch
          %295 = sbr.rel (%p293) target = $region40
        $region39: #{tpu_custom_call.1} parent=35 // pred_region
          %296 = dma.done %s289, 128
        $region40: #{tpu_custom_call.1} parent=35 // pred_fallthru
          _
        %s297 = sand.u32 %s28, 1
        %s298 = scalar_lea.sflag [#allocation6], %s297
        %s299 = sand.u32 %s76, 1
        %s300 = smul.addr %s299, 128
        %s301 = scalar_lea.vmem [#allocation5], %s300
        // Predicated region
        $region41: #{tpu_custom_call.1} parent=35 // pred_check
          %p302 = pneg %p89
        $region42: #{tpu_custom_call.1} parent=35 // pred_check_branch
          %304 = sbr.rel (%p302) target = $region44
        $region43: #{tpu_custom_call.1} parent=35 // pred_region
          %305 = dma.done %s298, 2048
        $region44: #{tpu_custom_call.1} parent=35 // pred_fallthru
          _
        %s306 = sand.u32 %s28, 1
        %s307 = scalar_lea.sflag [#allocation6], %s306
        %s308 = sand.u32 %s102, 1
        %s309 = smul.addr %s308, 128
        %s310 = scalar_lea.vmem [#allocation7], %s309
        // Predicated region
        $region45: #{tpu_custom_call.1} parent=35 // pred_check
          %p311 = pneg %p115
        $region46: #{tpu_custom_call.1} parent=35 // pred_check_branch
          %313 = sbr.rel (%p311) target = $region48
        $region47: #{tpu_custom_call.1} parent=35 // pred_region
          %314 = dma.done %s307, 2048
        $region48: #{tpu_custom_call.1} parent=35 // pred_fallthru
          _
        %s315 = sand.u32 %s50, 1
        %s316 = scalar_lea.sflag [#allocation3], %s315
        %s317 = sand.u32 %s50, 1
        %s318 = smul.addr %s317, 8
        %s319 = scalar_lea.vmem [#allocation2], %s318
        %p320 = pneg %p63
        %p321 = pneg %p60
        %s322 = sand.u32 %s28, 1
        %s323 = scalar_lea.sflag [#allocation6], %s322
        %s324 = sand.u32 %s76, 1
        %s325 = smul.addr %s324, 128
        %s326 = scalar_lea.vmem [#allocation5], %s325
        %p327 = pneg %p89
        %p328 = pneg %p86
        %s329 = sand.u32 %s28, 1
        %s330 = scalar_lea.sflag [#allocation6], %s329
        %s331 = sand.u32 %s102, 1
        %s332 = smul.addr %s331, 128
        %s333 = scalar_lea.vmem [#allocation7], %s332
        %p334 = pneg %p115
        %p335 = pneg %p112
        %p336 = scmp.lt.s32.totalorder %s33, 2
        %s337 = scalar_select %p336, %s33, 2
        %s338 = scalar_lea.vmem %s4, %s337
        %p339 = pneg %p141
        %p340 = pneg %p138
        %p341 = pneg %p167
        %p342 = pneg %p164
        %p343 = pneg %p195
        %p344 = pneg %p192
        %s345 = sand.u32 %s182, 1
        %s346 = scalar_lea.sflag [#allocation10], %s345
        %s347 = sand.u32 %s182, 1
        %s348 = smul.addr %s347, 64
        %s349 = scalar_lea.vmem [#allocation9], %s348
        %p350 = scmp.lt.s32.totalorder %s33, 2
        %s351 = scalar_select %p350, %s33, 2
        %s352 = scalar_lea.vmem %s4, %s351
        %p353 = scmp.eq.s32.totalorder %s33, 0
        // Predicated region
        $region49: #{tpu_custom_call.1} parent=35 // pred_check
          %p354 = pneg %p353
        $region50: #{tpu_custom_call.1} parent=35 // pred_check_branch
          %356 = sbr.rel (%p354) target = $region52
        $region51: #{tpu_custom_call.1} parent=35 // pred_region
          $region53: #{tpu_custom_call.1} parent=51
            #allocation11 [shape = 's32[1]{0}', space=sflag, size = 0x4, scoped, tag = 'scoped memory for tpu_custom_call.1']
            %s357 = smul.u32 %s32, 64
            %s358 = smul.addr %s357, 16
            %s359 = scalar_lea.hbm %s0, %s358
            // Predicated region
            $region54: #{tpu_custom_call.1} parent=53 // pred_check
              _
            $region55: #{tpu_custom_call.1} parent=53 // pred_check_branch
              %361 = sbr.rel target = $region57
            $region56: #{tpu_custom_call.1} parent=53 // pred_region
              %362 = sst [smem:[#allocation14]] [#allocation13]
              %363 = sst [smem:[#allocation15]] [#allocation12]
            $region57: #{tpu_custom_call.1} parent=53 // pred_fallthru
              _
            %365 = shalt.err (0)
            %s367 = sshll.u32 [#allocation8], 4
            %s368 = int_to_ptr.vmem [resolvable:$true] %s367
            %370 = dma.hbm_to_vmem [thread:$0]  %s359, 1024, %s368, [#allocation11]
            %s371 = smul.u32 8, 8
            %s372 = smul.u32 %s371, 1
            %s373 = sshll.u32 %s372, 4
            %374 = dma.done [#allocation11], %s373
        $region52: #{tpu_custom_call.1} parent=35 // pred_fallthru
          _
        %v375 = vld [vmem:[%s301] sm:$0xff]
        %v376 = vld [vmem:[%s301 + $0x8] sm:$0xff]
        %v377 = vld [vmem:[%s301 + $0x10] sm:$0xff]
        %v378 = vld [vmem:[%s301 + $0x18] sm:$0xff]
        %v379 = vld [vmem:[%s301 + $0x20] sm:$0xff]
        %v380 = vld [vmem:[%s301 + $0x28] sm:$0xff]
        %v381 = vld [vmem:[%s301 + $0x30] sm:$0xff]
        %v382 = vld [vmem:[%s301 + $0x38] sm:$0xff]
        %v383 = vld [vmem:[%s301 + $0x40] sm:$0xff]
        %v384 = vld [vmem:[%s301 + $0x48] sm:$0xff]
        %v385 = vld [vmem:[%s301 + $0x50] sm:$0xff]
        %v386 = vld [vmem:[%s301 + $0x58] sm:$0xff]
        %v387 = vld [vmem:[%s301 + $0x60] sm:$0xff]
        %v388 = vld [vmem:[%s301 + $0x68] sm:$0xff]
        %v389 = vld [vmem:[%s301 + $0x70] sm:$0xff]
        %v390 = vld [vmem:[%s301 + $0x78] sm:$0xff]
        %v391 = vld [vmem:[%s310] sm:$0xff]
        %v392 = vld [vmem:[%s310 + $0x8] sm:$0xff]
        %v393 = vld [vmem:[%s310 + $0x10] sm:$0xff]
        %v394 = vld [vmem:[%s310 + $0x18] sm:$0xff]
        %v395 = vld [vmem:[%s310 + $0x20] sm:$0xff]
        %v396 = vld [vmem:[%s310 + $0x28] sm:$0xff]
        %v397 = vld [vmem:[%s310 + $0x30] sm:$0xff]
        %v398 = vld [vmem:[%s310 + $0x38] sm:$0xff]
        %v399 = vld [vmem:[%s310 + $0x40] sm:$0xff]
        %v400 = vld [vmem:[%s310 + $0x48] sm:$0xff]
        %v401 = vld [vmem:[%s310 + $0x50] sm:$0xff]
        %v402 = vld [vmem:[%s310 + $0x58] sm:$0xff]
        %v403 = vld [vmem:[%s310 + $0x60] sm:$0xff]
        %v404 = vld [vmem:[%s310 + $0x68] sm:$0xff]
        %v405 = vld [vmem:[%s310 + $0x70] sm:$0xff]
        %v406 = vld [vmem:[%s310 + $0x78] sm:$0xff]
        %v407 = vld [vmem:[%s352] sm:$0x1]
        %v408 = vld [vmem:[#allocation8] sm:$0xff]
        %v409 = vld [vmem:[#allocation8 + $0x8] sm:$0xff]
        %v410 = vld [vmem:[#allocation8 + $0x10] sm:$0xff]
        %v411 = vld [vmem:[#allocation8 + $0x18] sm:$0xff]
        %v412 = vld [vmem:[#allocation8 + $0x20] sm:$0xff]
        %v413 = vld [vmem:[#allocation8 + $0x28] sm:$0xff]
        %v414 = vld [vmem:[#allocation8 + $0x30] sm:$0xff]
        %v415 = vld [vmem:[#allocation8 + $0x38] sm:$0xff]
        %v417 = vlaneseq
        %v418 = vshrl.u32 %v417, 7
        %v419 = vsub.s32 0, %v418
        %v420 = vrot.slane %v407, %v419
        %422 = vmatprep.subr.mxu0 0.0
        %423 = vmatpush1.msra.mxu0 %v375
        %424 = vmatprep.subr.mxu0 0.0
        %425 = vmatpush1.msra.mxu0 %v376
        %426 = vmatprep.subr.mxu0 0.0
        %427 = vmatpush1.msra.mxu0 %v377
        %428 = vmatprep.subr.mxu0 0.0
        %429 = vmatpush1.msra.mxu0 %v378
        %430 = vmatprep.subr.mxu0 0.0
        %431 = vmatpush1.msra.mxu0 %v379
        %432 = vmatprep.subr.mxu0 0.0
        %433 = vmatpush1.msra.mxu0 %v380
        %434 = vmatprep.subr.mxu0 0.0
        %435 = vmatpush1.msra.mxu0 %v381
        %436 = vmatprep.subr.mxu0 0.0
        %437 = vmatpush1.msra.mxu0 %v382
        %438 = vmatprep.subr.mxu0 0.0
        %439 = vmatpush1.msra.mxu0 %v383
        %440 = vmatprep.subr.mxu0 0.0
        %441 = vmatpush1.msra.mxu0 %v384
        %442 = vmatprep.subr.mxu0 0.0
        %443 = vmatpush1.msra.mxu0 %v385
        %444 = vmatprep.subr.mxu0 0.0
        %445 = vmatpush1.msra.mxu0 %v386
        %446 = vmatprep.subr.mxu0 0.0
        %447 = vmatpush1.msra.mxu0 %v387
        %448 = vmatprep.subr.mxu0 0.0
        %449 = vmatpush1.msra.mxu0 %v388
        %450 = vmatprep.subr.mxu0 0.0
        %451 = vmatpush1.msra.mxu0 %v389
        %452 = vmatprep.subr.mxu0 0.0
        %453 = vmatpush1.msra.mxu0 %v390
        %454 = vmatprep.subr.mxu0 0.0
        %455 = vmatpush1.msra.mxu0 0.0
        %456 = vmatprep.subr.mxu0 0.0
        %457 = vmatpush1.msra.mxu0 0.0
        %458 = vmatprep.subr.mxu0 0.0
        %459 = vmatpush1.msra.mxu0 0.0
        %460 = vmatprep.subr.mxu0 0.0
        %461 = vmatpush1.msra.mxu0 0.0
        %462 = vmatprep.subr.mxu0 0.0
        %463 = vmatpush1.msra.mxu0 0.0
        %464 = vmatprep.subr.mxu0 0.0
        %465 = vmatpush1.msra.mxu0 0.0
        %466 = vmatprep.subr.mxu0 0.0
        %467 = vmatpush1.msra.mxu0 0.0
        %468 = vmatprep.subr.mxu0 0.0
        %469 = vmatpush1.msra.mxu0 0.0
        %470 = vmatprep.subr.mxu0 0.0
        %471 = vmatpush1.msra.mxu0 0.0
        %472 = vmatprep.subr.mxu0 0.0
        %473 = vmatpush1.msra.mxu0 0.0
        %474 = vmatprep.subr.mxu0 0.0
        %475 = vmatpush1.msra.mxu0 0.0
        %476 = vmatprep.subr.mxu0 0.0
        %477 = vmatpush1.msra.mxu0 0.0
        %478 = vmatprep.subr.mxu0 0.0
        %479 = vmatpush1.msra.mxu0 0.0
        %480 = vmatprep.subr.mxu0 0.0
        %481 = vmatpush1.msra.mxu0 0.0
        %482 = vmatprep.subr.mxu0 0.0
        %483 = vmatpush1.msra.mxu0 0.0
        %484 = vmatprep.subr.mxu0 0.0
        %485 = vmatpush1.msra.mxu0 0.0
        %486 = vmatprep.mubr.f32.mxu0 0.0
        %487 = vmatmul.mubr.f32.gmra.mrb[0].mxu0 %v408
        %v488 = vpop.f32.mrb[0].mxu0
        %v489 = vadd.f32 %v420, %v488
        %v490 = vpop.f32.mrb[0].mxu0
        %491 = vmatprep.mubr.f32.mxu0 0.0
        %492 = vmatmul.mubr.f32.gmra.mrb[0].mxu0 %v409
        %v493 = vpop.f32.mrb[0].mxu0
        %v494 = vadd.f32 %v420, %v493
        %v495 = vpop.f32.mrb[0].mxu0
        %496 = vmatprep.mubr.f32.mxu0 0.0
        %497 = vmatmul.mubr.f32.gmra.mrb[0].mxu0 %v410
        %v498 = vpop.f32.mrb[0].mxu0
        %v499 = vadd.f32 %v420, %v498
        %v500 = vpop.f32.mrb[0].mxu0
        %501 = vmatprep.mubr.f32.mxu0 0.0
        %502 = vmatmul.mubr.f32.gmra.mrb[0].mxu0 %v411
        %v503 = vpop.f32.mrb[0].mxu0
        %v504 = vadd.f32 %v420, %v503
        %v505 = vpop.f32.mrb[0].mxu0
        %506 = vmatprep.mubr.f32.mxu0 0.0
        %507 = vmatmul.mubr.f32.gmra.mrb[0].mxu0 %v412
        %v508 = vpop.f32.mrb[0].mxu0
        %v509 = vadd.f32 %v420, %v508
        %v510 = vpop.f32.mrb[0].mxu0
        %511 = vmatprep.mubr.f32.mxu0 0.0
        %512 = vmatmul.mubr.f32.gmra.mrb[0].mxu0 %v413
        %v513 = vpop.f32.mrb[0].mxu0
        %v514 = vadd.f32 %v420, %v513
        %v515 = vpop.f32.mrb[0].mxu0
        %516 = vmatprep.mubr.f32.mxu0 0.0
        %517 = vmatmul.mubr.f32.gmra.mrb[0].mxu0 %v414
        %v518 = vpop.f32.mrb[0].mxu0
        %v519 = vadd.f32 %v420, %v518
        %v520 = vpop.f32.mrb[0].mxu0
        %521 = vmatprep.mubr.f32.mxu0 0.0
        %522 = vmatmul.mubr.f32.gmra.mrb[0].mxu0 %v415
        %v523 = vpop.f32.mrb[0].mxu0
        %v524 = vadd.f32 %v420, %v523
        %v525 = vpop.f32.mrb[0].mxu0
        %526 = vdwg.mxu0
        %527 = vst [vmem:[#allocation8] sm:$0xff] %v489
        %528 = vst [vmem:[#allocation8 + $0x8] sm:$0xff] %v494
        %529 = vst [vmem:[#allocation8 + $0x10] sm:$0xff] %v499
        %530 = vst [vmem:[#allocation8 + $0x18] sm:$0xff] %v504
        %531 = vst [vmem:[#allocation8 + $0x20] sm:$0xff] %v509
        %532 = vst [vmem:[#allocation8 + $0x28] sm:$0xff] %v514
        %533 = vst [vmem:[#allocation8 + $0x30] sm:$0xff] %v519
        %534 = vst [vmem:[#allocation8 + $0x38] sm:$0xff] %v524
        %v535 = vld [vmem:[%s292] sm:$0xff]
        %v536 = vld [vmem:[#allocation8] sm:$0xff]
        %537 = vmatprep.subr.mxu0 0.0
        %538 = vmatpush1.msra.mxu0 %v391
        %539 = vmatprep.subr.mxu0 0.0
        %540 = vmatpush1.msra.mxu0 %v392
        %541 = vmatprep.subr.mxu0 0.0
        %542 = vmatpush1.msra.mxu0 %v393
        %543 = vmatprep.subr.mxu0 0.0
        %544 = vmatpush1.msra.mxu0 %v394
        %545 = vmatprep.subr.mxu0 0.0
        %546 = vmatpush1.msra.mxu0 %v395
        %547 = vmatprep.subr.mxu0 0.0
        %548 = vmatpush1.msra.mxu0 %v396
        %549 = vmatprep.subr.mxu0 0.0
        %550 = vmatpush1.msra.mxu0 %v397
        %551 = vmatprep.subr.mxu0 0.0
        %552 = vmatpush1.msra.mxu0 %v398
        %553 = vmatprep.subr.mxu0 0.0
        %554 = vmatpush1.msra.mxu0 %v399
        %555 = vmatprep.subr.mxu0 0.0
        %556 = vmatpush1.msra.mxu0 %v400
        %557 = vmatprep.subr.mxu0 0.0
        %558 = vmatpush1.msra.mxu0 %v401
        %559 = vmatprep.subr.mxu0 0.0
        %560 = vmatpush1.msra.mxu0 %v402
        %561 = vmatprep.subr.mxu0 0.0
        %562 = vmatpush1.msra.mxu0 %v403
        %563 = vmatprep.subr.mxu0 0.0
        %564 = vmatpush1.msra.mxu0 %v404
        %565 = vmatprep.subr.mxu0 0.0
        %566 = vmatpush1.msra.mxu0 %v405
        %567 = vmatprep.subr.mxu0 0.0
        %568 = vmatpush1.msra.mxu0 %v406
        %569 = vmatprep.subr.mxu0 0.0
        %570 = vmatpush1.msra.mxu0 0.0
        %571 = vmatprep.subr.mxu0 0.0
        %572 = vmatpush1.msra.mxu0 0.0
        %573 = vmatprep.subr.mxu0 0.0
        %574 = vmatpush1.msra.mxu0 0.0
        %575 = vmatprep.subr.mxu0 0.0
        %576 = vmatpush1.msra.mxu0 0.0
        %577 = vmatprep.subr.mxu0 0.0
        %578 = vmatpush1.msra.mxu0 0.0
        %579 = vmatprep.subr.mxu0 0.0
        %580 = vmatpush1.msra.mxu0 0.0
        %581 = vmatprep.subr.mxu0 0.0
        %582 = vmatpush1.msra.mxu0 0.0
        %583 = vmatprep.subr.mxu0 0.0
        %584 = vmatpush1.msra.mxu0 0.0
        %585 = vmatprep.subr.mxu0 0.0
        %586 = vmatpush1.msra.mxu0 0.0
        %587 = vmatprep.subr.mxu0 0.0
        %588 = vmatpush1.msra.mxu0 0.0
        %589 = vmatprep.subr.mxu0 0.0
        %590 = vmatpush1.msra.mxu0 0.0
        %591 = vmatprep.subr.mxu0 0.0
        %592 = vmatpush1.msra.mxu0 0.0
        %593 = vmatprep.subr.mxu0 0.0
        %594 = vmatpush1.msra.mxu0 0.0
        %595 = vmatprep.subr.mxu0 0.0
        %596 = vmatpush1.msra.mxu0 0.0
        %597 = vmatprep.subr.mxu0 0.0
        %598 = vmatpush1.msra.mxu0 0.0
        %599 = vmatprep.subr.mxu0 0.0
        %600 = vmatpush1.msra.mxu0 0.0
        %601 = vmatprep.mubr.f32.mxu0 0.0
        %602 = vmatmul.mubr.f32.gmra.mrb[0].mxu0 %v535
        %v603 = vpop.f32.mrb[0].mxu0
        %v604 = vadd.f32 0.0, %v603
        %v605 = vpop.f32.mrb[0].mxu0
        %606 = vdwg.mxu0
        %v607 = vadd.f32 %v536, %v604
        %v608 = vtanh.pop %v607
        %609 = vst [vmem:[#allocation8] sm:$0xff] %v608
        %610 = vst [vmem:[%s349] sm:$0xff] %v608
        %s611 = scalar_lea.vmem [#allocation8], 8
        %v612 = vld [vmem:[%s611] sm:$0xff]
        %613 = vmatprep.subr.mxu0 0.0
        %614 = vmatpush1.msra.mxu0 %v391
        %615 = vmatprep.subr.mxu0 0.0
        %616 = vmatpush1.msra.mxu0 %v392
        %617 = vmatprep.subr.mxu0 0.0
        %618 = vmatpush1.msra.mxu0 %v393
        %619 = vmatprep.subr.mxu0 0.0
        %620 = vmatpush1.msra.mxu0 %v394
        %621 = vmatprep.subr.mxu0 0.0
        %622 = vmatpush1.msra.mxu0 %v395
        %623 = vmatprep.subr.mxu0 0.0
        %624 = vmatpush1.msra.mxu0 %v396
        %625 = vmatprep.subr.mxu0 0.0
        %626 = vmatpush1.msra.mxu0 %v397
        %627 = vmatprep.subr.mxu0 0.0
        %628 = vmatpush1.msra.mxu0 %v398
        %629 = vmatprep.subr.mxu0 0.0
        %630 = vmatpush1.msra.mxu0 %v399
        %631 = vmatprep.subr.mxu0 0.0
        %632 = vmatpush1.msra.mxu0 %v400
        %633 = vmatprep.subr.mxu0 0.0
        %634 = vmatpush1.msra.mxu0 %v401
        %635 = vmatprep.subr.mxu0 0.0
        %636 = vmatpush1.msra.mxu0 %v402
        %637 = vmatprep.subr.mxu0 0.0
        %638 = vmatpush1.msra.mxu0 %v403
        %639 = vmatprep.subr.mxu0 0.0
        %640 = vmatpush1.msra.mxu0 %v404
        %641 = vmatprep.subr.mxu0 0.0
        %642 = vmatpush1.msra.mxu0 %v405
        %643 = vmatprep.subr.mxu0 0.0
        %644 = vmatpush1.msra.mxu0 %v406
        %645 = vmatprep.subr.mxu0 0.0
        %646 = vmatpush1.msra.mxu0 0.0
        %647 = vmatprep.subr.mxu0 0.0
        %648 = vmatpush1.msra.mxu0 0.0
        %649 = vmatprep.subr.mxu0 0.0
        %650 = vmatpush1.msra.mxu0 0.0
        %651 = vmatprep.subr.mxu0 0.0
        %652 = vmatpush1.msra.mxu0 0.0
        %653 = vmatprep.subr.mxu0 0.0
        %654 = vmatpush1.msra.mxu0 0.0
        %655 = vmatprep.subr.mxu0 0.0
        %656 = vmatpush1.msra.mxu0 0.0
        %657 = vmatprep.subr.mxu0 0.0
        %658 = vmatpush1.msra.mxu0 0.0
        %659 = vmatprep.subr.mxu0 0.0
        %660 = vmatpush1.msra.mxu0 0.0
        %661 = vmatprep.subr.mxu0 0.0
        %662 = vmatpush1.msra.mxu0 0.0
        %663 = vmatprep.subr.mxu0 0.0
        %664 = vmatpush1.msra.mxu0 0.0
        %665 = vmatprep.subr.mxu0 0.0
        %666 = vmatpush1.msra.mxu0 0.0
        %667 = vmatprep.subr.mxu0 0.0
        %668 = vmatpush1.msra.mxu0 0.0
        %669 = vmatprep.subr.mxu0 0.0
        %670 = vmatpush1.msra.mxu0 0.0
        %671 = vmatprep.subr.mxu0 0.0
        %672 = vmatpush1.msra.mxu0 0.0
        %673 = vmatprep.subr.mxu0 0.0
        %674 = vmatpush1.msra.mxu0 0.0
        %675 = vmatprep.subr.mxu0 0.0
        %676 = vmatpush1.msra.mxu0 0.0
        %677 = vmatprep.mubr.f32.mxu0 0.0
        %678 = vmatmul.mubr.f32.gmra.mrb[0].mxu0 %v608
        %v679 = vpop.f32.mrb[0].mxu0
        %v680 = vadd.f32 0.0, %v679
        %v681 = vpop.f32.mrb[0].mxu0
        %682 = vdwg.mxu0
        %v683 = vadd.f32 %v612, %v680
        %v684 = vtanh.pop %v683
        %685 = vst [vmem:[%s611] sm:$0xff] %v684
        %s686 = scalar_lea.vmem %s349, 8 [#allocation9]
        %687 = vst [vmem:[%s686] sm:$0xff] %v684
        %s688 = scalar_lea.vmem [#allocation8], 16
        %v689 = vld [vmem:[%s688] sm:$0xff]
        %690 = vmatprep.subr.mxu0 0.0
        %691 = vmatpush1.msra.mxu0 %v391
        %692 = vmatprep.subr.mxu0 0.0
        %693 = vmatpush1.msra.mxu0 %v392
        %694 = vmatprep.subr.mxu0 0.0
        %695 = vmatpush1.msra.mxu0 %v393
        %696 = vmatprep.subr.mxu0 0.0
        %697 = vmatpush1.msra.mxu0 %v394
        %698 = vmatprep.subr.mxu0 0.0
        %699 = vmatpush1.msra.mxu0 %v395
        %700 = vmatprep.subr.mxu0 0.0
        %701 = vmatpush1.msra.mxu0 %v396
        %702 = vmatprep.subr.mxu0 0.0
        %703 = vmatpush1.msra.mxu0 %v397
        %704 = vmatprep.subr.mxu0 0.0
        %705 = vmatpush1.msra.mxu0 %v398
        %706 = vmatprep.subr.mxu0 0.0
        %707 = vmatpush1.msra.mxu0 %v399
        %708 = vmatprep.subr.mxu0 0.0
        %709 = vmatpush1.msra.mxu0 %v400
        %710 = vmatprep.subr.mxu0 0.0
        %711 = vmatpush1.msra.mxu0 %v401
        %712 = vmatprep.subr.mxu0 0.0
        %713 = vmatpush1.msra.mxu0 %v402
        %714 = vmatprep.subr.mxu0 0.0
        %715 = vmatpush1.msra.mxu0 %v403
        %716 = vmatprep.subr.mxu0 0.0
        %717 = vmatpush1.msra.mxu0 %v404
        %718 = vmatprep.subr.mxu0 0.0
        %719 = vmatpush1.msra.mxu0 %v405
        %720 = vmatprep.subr.mxu0 0.0
        %721 = vmatpush1.msra.mxu0 %v406
        %722 = vmatprep.subr.mxu0 0.0
        %723 = vmatpush1.msra.mxu0 0.0
        %724 = vmatprep.subr.mxu0 0.0
        %725 = vmatpush1.msra.mxu0 0.0
        %726 = vmatprep.subr.mxu0 0.0
        %727 = vmatpush1.msra.mxu0 0.0
        %728 = vmatprep.subr.mxu0 0.0
        %729 = vmatpush1.msra.mxu0 0.0
        %730 = vmatprep.subr.mxu0 0.0
        %731 = vmatpush1.msra.mxu0 0.0
        %732 = vmatprep.subr.mxu0 0.0
        %733 = vmatpush1.msra.mxu0 0.0
        %734 = vmatprep.subr.mxu0 0.0
        %735 = vmatpush1.msra.mxu0 0.0
        %736 = vmatprep.subr.mxu0 0.0
        %737 = vmatpush1.msra.mxu0 0.0
        %738 = vmatprep.subr.mxu0 0.0
        %739 = vmatpush1.msra.mxu0 0.0
        %740 = vmatprep.subr.mxu0 0.0
        %741 = vmatpush1.msra.mxu0 0.0
        %742 = vmatprep.subr.mxu0 0.0
        %743 = vmatpush1.msra.mxu0 0.0
        %744 = vmatprep.subr.mxu0 0.0
        %745 = vmatpush1.msra.mxu0 0.0
        %746 = vmatprep.subr.mxu0 0.0
        %747 = vmatpush1.msra.mxu0 0.0
        %748 = vmatprep.subr.mxu0 0.0
        %749 = vmatpush1.msra.mxu0 0.0
        %750 = vmatprep.subr.mxu0 0.0
        %751 = vmatpush1.msra.mxu0 0.0
        %752 = vmatprep.subr.mxu0 0.0
        %753 = vmatpush1.msra.mxu0 0.0
        %754 = vmatprep.mubr.f32.mxu0 0.0
        %755 = vmatmul.mubr.f32.gmra.mrb[0].mxu0 %v684
        %v756 = vpop.f32.mrb[0].mxu0
        %v757 = vadd.f32 0.0, %v756
        %v758 = vpop.f32.mrb[0].mxu0
        %759 = vdwg.mxu0
        %v760 = vadd.f32 %v689, %v757
        %v761 = vtanh.pop %v760
        %762 = vst [vmem:[%s688] sm:$0xff] %v761
        %s763 = scalar_lea.vmem %s349, 16 [#allocation9]
        %764 = vst [vmem:[%s763] sm:$0xff] %v761
        %s765 = scalar_lea.vmem [#allocation8], 24
        %v766 = vld [vmem:[%s765] sm:$0xff]
        %767 = vmatprep.subr.mxu0 0.0
        %768 = vmatpush1.msra.mxu0 %v391
        %769 = vmatprep.subr.mxu0 0.0
        %770 = vmatpush1.msra.mxu0 %v392
        %771 = vmatprep.subr.mxu0 0.0
        %772 = vmatpush1.msra.mxu0 %v393
        %773 = vmatprep.subr.mxu0 0.0
        %774 = vmatpush1.msra.mxu0 %v394
        %775 = vmatprep.subr.mxu0 0.0
        %776 = vmatpush1.msra.mxu0 %v395
        %777 = vmatprep.subr.mxu0 0.0
        %778 = vmatpush1.msra.mxu0 %v396
        %779 = vmatprep.subr.mxu0 0.0
        %780 = vmatpush1.msra.mxu0 %v397
        %781 = vmatprep.subr.mxu0 0.0
        %782 = vmatpush1.msra.mxu0 %v398
        %783 = vmatprep.subr.mxu0 0.0
        %784 = vmatpush1.msra.mxu0 %v399
        %785 = vmatprep.subr.mxu0 0.0
        %786 = vmatpush1.msra.mxu0 %v400
        %787 = vmatprep.subr.mxu0 0.0
        %788 = vmatpush1.msra.mxu0 %v401
        %789 = vmatprep.subr.mxu0 0.0
        %790 = vmatpush1.msra.mxu0 %v402
        %791 = vmatprep.subr.mxu0 0.0
        %792 = vmatpush1.msra.mxu0 %v403
        %793 = vmatprep.subr.mxu0 0.0
        %794 = vmatpush1.msra.mxu0 %v404
        %795 = vmatprep.subr.mxu0 0.0
        %796 = vmatpush1.msra.mxu0 %v405
        %797 = vmatprep.subr.mxu0 0.0
        %798 = vmatpush1.msra.mxu0 %v406
        %799 = vmatprep.subr.mxu0 0.0
        %800 = vmatpush1.msra.mxu0 0.0
        %801 = vmatprep.subr.mxu0 0.0
        %802 = vmatpush1.msra.mxu0 0.0
        %803 = vmatprep.subr.mxu0 0.0
        %804 = vmatpush1.msra.mxu0 0.0
        %805 = vmatprep.subr.mxu0 0.0
        %806 = vmatpush1.msra.mxu0 0.0
        %807 = vmatprep.subr.mxu0 0.0
        %808 = vmatpush1.msra.mxu0 0.0
        %809 = vmatprep.subr.mxu0 0.0
        %810 = vmatpush1.msra.mxu0 0.0
        %811 = vmatprep.subr.mxu0 0.0
        %812 = vmatpush1.msra.mxu0 0.0
        %813 = vmatprep.subr.mxu0 0.0
        %814 = vmatpush1.msra.mxu0 0.0
        %815 = vmatprep.subr.mxu0 0.0
        %816 = vmatpush1.msra.mxu0 0.0
        %817 = vmatprep.subr.mxu0 0.0
        %818 = vmatpush1.msra.mxu0 0.0
        %819 = vmatprep.subr.mxu0 0.0
        %820 = vmatpush1.msra.mxu0 0.0
        %821 = vmatprep.subr.mxu0 0.0
        %822 = vmatpush1.msra.mxu0 0.0
        %823 = vmatprep.subr.mxu0 0.0
        %824 = vmatpush1.msra.mxu0 0.0
        %825 = vmatprep.subr.mxu0 0.0
        %826 = vmatpush1.msra.mxu0 0.0
        %827 = vmatprep.subr.mxu0 0.0
        %828 = vmatpush1.msra.mxu0 0.0
        %829 = vmatprep.subr.mxu0 0.0
        %830 = vmatpush1.msra.mxu0 0.0
        %831 = vmatprep.mubr.f32.mxu0 0.0
        %832 = vmatmul.mubr.f32.gmra.mrb[0].mxu0 %v761
        %v833 = vpop.f32.mrb[0].mxu0
        %v834 = vadd.f32 0.0, %v833
        %v835 = vpop.f32.mrb[0].mxu0
        %836 = vdwg.mxu0
        %v837 = vadd.f32 %v766, %v834
        %v838 = vtanh.pop %v837
        %839 = vst [vmem:[%s765] sm:$0xff] %v838
        %s840 = scalar_lea.vmem %s349, 24 [#allocation9]
        %841 = vst [vmem:[%s840] sm:$0xff] %v838
        %s842 = scalar_lea.vmem [#allocation8], 32
        %v843 = vld [vmem:[%s842] sm:$0xff]
        %844 = vmatprep.subr.mxu0 0.0
        %845 = vmatpush1.msra.mxu0 %v391
        %846 = vmatprep.subr.mxu0 0.0
        %847 = vmatpush1.msra.mxu0 %v392
        %848 = vmatprep.subr.mxu0 0.0
        %849 = vmatpush1.msra.mxu0 %v393
        %850 = vmatprep.subr.mxu0 0.0
        %851 = vmatpush1.msra.mxu0 %v394
        %852 = vmatprep.subr.mxu0 0.0
        %853 = vmatpush1.msra.mxu0 %v395
        %854 = vmatprep.subr.mxu0 0.0
        %855 = vmatpush1.msra.mxu0 %v396
        %856 = vmatprep.subr.mxu0 0.0
        %857 = vmatpush1.msra.mxu0 %v397
        %858 = vmatprep.subr.mxu0 0.0
        %859 = vmatpush1.msra.mxu0 %v398
        %860 = vmatprep.subr.mxu0 0.0
        %861 = vmatpush1.msra.mxu0 %v399
        %862 = vmatprep.subr.mxu0 0.0
        %863 = vmatpush1.msra.mxu0 %v400
        %864 = vmatprep.subr.mxu0 0.0
        %865 = vmatpush1.msra.mxu0 %v401
        %866 = vmatprep.subr.mxu0 0.0
        %867 = vmatpush1.msra.mxu0 %v402
        %868 = vmatprep.subr.mxu0 0.0
        %869 = vmatpush1.msra.mxu0 %v403
        %870 = vmatprep.subr.mxu0 0.0
        %871 = vmatpush1.msra.mxu0 %v404
        %872 = vmatprep.subr.mxu0 0.0
        %873 = vmatpush1.msra.mxu0 %v405
        %874 = vmatprep.subr.mxu0 0.0
        %875 = vmatpush1.msra.mxu0 %v406
        %876 = vmatprep.subr.mxu0 0.0
        %877 = vmatpush1.msra.mxu0 0.0
        %878 = vmatprep.subr.mxu0 0.0
        %879 = vmatpush1.msra.mxu0 0.0
        %880 = vmatprep.subr.mxu0 0.0
        %881 = vmatpush1.msra.mxu0 0.0
        %882 = vmatprep.subr.mxu0 0.0
        %883 = vmatpush1.msra.mxu0 0.0
        %884 = vmatprep.subr.mxu0 0.0
        %885 = vmatpush1.msra.mxu0 0.0
        %886 = vmatprep.subr.mxu0 0.0
        %887 = vmatpush1.msra.mxu0 0.0
        %888 = vmatprep.subr.mxu0 0.0
        %889 = vmatpush1.msra.mxu0 0.0
        %890 = vmatprep.subr.mxu0 0.0
        %891 = vmatpush1.msra.mxu0 0.0
        %892 = vmatprep.subr.mxu0 0.0
        %893 = vmatpush1.msra.mxu0 0.0
        %894 = vmatprep.subr.mxu0 0.0
        %895 = vmatpush1.msra.mxu0 0.0
        %896 = vmatprep.subr.mxu0 0.0
        %897 = vmatpush1.msra.mxu0 0.0
        %898 = vmatprep.subr.mxu0 0.0
        %899 = vmatpush1.msra.mxu0 0.0
        %900 = vmatprep.subr.mxu0 0.0
        %901 = vmatpush1.msra.mxu0 0.0
        %902 = vmatprep.subr.mxu0 0.0
        %903 = vmatpush1.msra.mxu0 0.0
        %904 = vmatprep.subr.mxu0 0.0
        %905 = vmatpush1.msra.mxu0 0.0
        %906 = vmatprep.subr.mxu0 0.0
        %907 = vmatpush1.msra.mxu0 0.0
        %908 = vmatprep.mubr.f32.mxu0 0.0
        %909 = vmatmul.mubr.f32.gmra.mrb[0].mxu0 %v838
        %v910 = vpop.f32.mrb[0].mxu0
        %v911 = vadd.f32 0.0, %v910
        %v912 = vpop.f32.mrb[0].mxu0
        %913 = vdwg.mxu0
        %v914 = vadd.f32 %v843, %v911
        %v915 = vtanh.pop %v914
        %916 = vst [vmem:[%s842] sm:$0xff] %v915
        %s917 = scalar_lea.vmem %s349, 32 [#allocation9]
        %918 = vst [vmem:[%s917] sm:$0xff] %v915
        %s919 = scalar_lea.vmem [#allocation8], 40
        %v920 = vld [vmem:[%s919] sm:$0xff]
        %921 = vmatprep.subr.mxu0 0.0
        %922 = vmatpush1.msra.mxu0 %v391
        %923 = vmatprep.subr.mxu0 0.0
        %924 = vmatpush1.msra.mxu0 %v392
        %925 = vmatprep.subr.mxu0 0.0
        %926 = vmatpush1.msra.mxu0 %v393
        %927 = vmatprep.subr.mxu0 0.0
        %928 = vmatpush1.msra.mxu0 %v394
        %929 = vmatprep.subr.mxu0 0.0
        %930 = vmatpush1.msra.mxu0 %v395
        %931 = vmatprep.subr.mxu0 0.0
        %932 = vmatpush1.msra.mxu0 %v396
        %933 = vmatprep.subr.mxu0 0.0
        %934 = vmatpush1.msra.mxu0 %v397
        %935 = vmatprep.subr.mxu0 0.0
        %936 = vmatpush1.msra.mxu0 %v398
        %937 = vmatprep.subr.mxu0 0.0
        %938 = vmatpush1.msra.mxu0 %v399
        %939 = vmatprep.subr.mxu0 0.0
        %940 = vmatpush1.msra.mxu0 %v400
        %941 = vmatprep.subr.mxu0 0.0
        %942 = vmatpush1.msra.mxu0 %v401
        %943 = vmatprep.subr.mxu0 0.0
        %944 = vmatpush1.msra.mxu0 %v402
        %945 = vmatprep.subr.mxu0 0.0
        %946 = vmatpush1.msra.mxu0 %v403
        %947 = vmatprep.subr.mxu0 0.0
        %948 = vmatpush1.msra.mxu0 %v404
        %949 = vmatprep.subr.mxu0 0.0
        %950 = vmatpush1.msra.mxu0 %v405
        %951 = vmatprep.subr.mxu0 0.0
        %952 = vmatpush1.msra.mxu0 %v406
        %953 = vmatprep.subr.mxu0 0.0
        %954 = vmatpush1.msra.mxu0 0.0
        %955 = vmatprep.subr.mxu0 0.0
        %956 = vmatpush1.msra.mxu0 0.0
        %957 = vmatprep.subr.mxu0 0.0
        %958 = vmatpush1.msra.mxu0 0.0
        %959 = vmatprep.subr.mxu0 0.0
        %960 = vmatpush1.msra.mxu0 0.0
        %961 = vmatprep.subr.mxu0 0.0
        %962 = vmatpush1.msra.mxu0 0.0
        %963 = vmatprep.subr.mxu0 0.0
        %964 = vmatpush1.msra.mxu0 0.0
        %965 = vmatprep.subr.mxu0 0.0
        %966 = vmatpush1.msra.mxu0 0.0
        %967 = vmatprep.subr.mxu0 0.0
        %968 = vmatpush1.msra.mxu0 0.0
        %969 = vmatprep.subr.mxu0 0.0
        %970 = vmatpush1.msra.mxu0 0.0
        %971 = vmatprep.subr.mxu0 0.0
        %972 = vmatpush1.msra.mxu0 0.0
        %973 = vmatprep.subr.mxu0 0.0
        %974 = vmatpush1.msra.mxu0 0.0
        %975 = vmatprep.subr.mxu0 0.0
        %976 = vmatpush1.msra.mxu0 0.0
        %977 = vmatprep.subr.mxu0 0.0
        %978 = vmatpush1.msra.mxu0 0.0
        %979 = vmatprep.subr.mxu0 0.0
        %980 = vmatpush1.msra.mxu0 0.0
        %981 = vmatprep.subr.mxu0 0.0
        %982 = vmatpush1.msra.mxu0 0.0
        %983 = vmatprep.subr.mxu0 0.0
        %984 = vmatpush1.msra.mxu0 0.0
        %985 = vmatprep.mubr.f32.mxu0 0.0
        %986 = vmatmul.mubr.f32.gmra.mrb[0].mxu0 %v915
        %v987 = vpop.f32.mrb[0].mxu0
        %v988 = vadd.f32 0.0, %v987
        %v989 = vpop.f32.mrb[0].mxu0
        %990 = vdwg.mxu0
        %v991 = vadd.f32 %v920, %v988
        %v992 = vtanh.pop %v991
        %993 = vst [vmem:[%s919] sm:$0xff] %v992
        %s994 = scalar_lea.vmem %s349, 40 [#allocation9]
        %995 = vst [vmem:[%s994] sm:$0xff] %v992
        %s996 = scalar_lea.vmem [#allocation8], 48
        %v997 = vld [vmem:[%s996] sm:$0xff]
        %998 = vmatprep.subr.mxu0 0.0
        %999 = vmatpush1.msra.mxu0 %v391
        %1000 = vmatprep.subr.mxu0 0.0
        %1001 = vmatpush1.msra.mxu0 %v392
        %1002 = vmatprep.subr.mxu0 0.0
        %1003 = vmatpush1.msra.mxu0 %v393
        %1004 = vmatprep.subr.mxu0 0.0
        %1005 = vmatpush1.msra.mxu0 %v394
        %1006 = vmatprep.subr.mxu0 0.0
        %1007 = vmatpush1.msra.mxu0 %v395
        %1008 = vmatprep.subr.mxu0 0.0
        %1009 = vmatpush1.msra.mxu0 %v396
        %1010 = vmatprep.subr.mxu0 0.0
        %1011 = vmatpush1.msra.mxu0 %v397
        %1012 = vmatprep.subr.mxu0 0.0
        %1013 = vmatpush1.msra.mxu0 %v398
        %1014 = vmatprep.subr.mxu0 0.0
        %1015 = vmatpush1.msra.mxu0 %v399
        %1016 = vmatprep.subr.mxu0 0.0
        %1017 = vmatpush1.msra.mxu0 %v400
        %1018 = vmatprep.subr.mxu0 0.0
        %1019 = vmatpush1.msra.mxu0 %v401
        %1020 = vmatprep.subr.mxu0 0.0
        %1021 = vmatpush1.msra.mxu0 %v402
        %1022 = vmatprep.subr.mxu0 0.0
        %1023 = vmatpush1.msra.mxu0 %v403
        %1024 = vmatprep.subr.mxu0 0.0
        %1025 = vmatpush1.msra.mxu0 %v404
        %1026 = vmatprep.subr.mxu0 0.0
        %1027 = vmatpush1.msra.mxu0 %v405
        %1028 = vmatprep.subr.mxu0 0.0
        %1029 = vmatpush1.msra.mxu0 %v406
        %1030 = vmatprep.subr.mxu0 0.0
        %1031 = vmatpush1.msra.mxu0 0.0
        %1032 = vmatprep.subr.mxu0 0.0
        %1033 = vmatpush1.msra.mxu0 0.0
        %1034 = vmatprep.subr.mxu0 0.0
        %1035 = vmatpush1.msra.mxu0 0.0
        %1036 = vmatprep.subr.mxu0 0.0
        %1037 = vmatpush1.msra.mxu0 0.0
        %1038 = vmatprep.subr.mxu0 0.0
        %1039 = vmatpush1.msra.mxu0 0.0
        %1040 = vmatprep.subr.mxu0 0.0
        %1041 = vmatpush1.msra.mxu0 0.0
        %1042 = vmatprep.subr.mxu0 0.0
        %1043 = vmatpush1.msra.mxu0 0.0
        %1044 = vmatprep.subr.mxu0 0.0
        %1045 = vmatpush1.msra.mxu0 0.0
        %1046 = vmatprep.subr.mxu0 0.0
        %1047 = vmatpush1.msra.mxu0 0.0
        %1048 = vmatprep.subr.mxu0 0.0
        %1049 = vmatpush1.msra.mxu0 0.0
        %1050 = vmatprep.subr.mxu0 0.0
        %1051 = vmatpush1.msra.mxu0 0.0
        %1052 = vmatprep.subr.mxu0 0.0
        %1053 = vmatpush1.msra.mxu0 0.0
        %1054 = vmatprep.subr.mxu0 0.0
        %1055 = vmatpush1.msra.mxu0 0.0
        %1056 = vmatprep.subr.mxu0 0.0
        %1057 = vmatpush1.msra.mxu0 0.0
        %1058 = vmatprep.subr.mxu0 0.0
        %1059 = vmatpush1.msra.mxu0 0.0
        %1060 = vmatprep.subr.mxu0 0.0
        %1061 = vmatpush1.msra.mxu0 0.0
        %1062 = vmatprep.mubr.f32.mxu0 0.0
        %1063 = vmatmul.mubr.f32.gmra.mrb[0].mxu0 %v992
        %v1064 = vpop.f32.mrb[0].mxu0
        %v1065 = vadd.f32 0.0, %v1064
        %v1066 = vpop.f32.mrb[0].mxu0
        %1067 = vdwg.mxu0
        %v1068 = vadd.f32 %v997, %v1065
        %v1069 = vtanh.pop %v1068
        %1070 = vst [vmem:[%s996] sm:$0xff] %v1069
        %s1071 = scalar_lea.vmem %s349, 48 [#allocation9]
        %1072 = vst [vmem:[%s1071] sm:$0xff] %v1069
        %s1073 = scalar_lea.vmem [#allocation8], 56
        %v1074 = vld [vmem:[%s1073] sm:$0xff]
        %1075 = vmatprep.subr.mxu0 0.0
        %1076 = vmatpush1.msra.mxu0 %v391
        %1077 = vmatprep.subr.mxu0 0.0
        %1078 = vmatpush1.msra.mxu0 %v392
        %1079 = vmatprep.subr.mxu0 0.0
        %1080 = vmatpush1.msra.mxu0 %v393
        %1081 = vmatprep.subr.mxu0 0.0
        %1082 = vmatpush1.msra.mxu0 %v394
        %1083 = vmatprep.subr.mxu0 0.0
        %1084 = vmatpush1.msra.mxu0 %v395
        %1085 = vmatprep.subr.mxu0 0.0
        %1086 = vmatpush1.msra.mxu0 %v396
        %1087 = vmatprep.subr.mxu0 0.0
        %1088 = vmatpush1.msra.mxu0 %v397
        %1089 = vmatprep.subr.mxu0 0.0
        %1090 = vmatpush1.msra.mxu0 %v398
        %1091 = vmatprep.subr.mxu0 0.0
        %1092 = vmatpush1.msra.mxu0 %v399
        %1093 = vmatprep.subr.mxu0 0.0
        %1094 = vmatpush1.msra.mxu0 %v400
        %1095 = vmatprep.subr.mxu0 0.0
        %1096 = vmatpush1.msra.mxu0 %v401
        %1097 = vmatprep.subr.mxu0 0.0
        %1098 = vmatpush1.msra.mxu0 %v402
        %1099 = vmatprep.subr.mxu0 0.0
        %1100 = vmatpush1.msra.mxu0 %v403
        %1101 = vmatprep.subr.mxu0 0.0
        %1102 = vmatpush1.msra.mxu0 %v404
        %1103 = vmatprep.subr.mxu0 0.0
        %1104 = vmatpush1.msra.mxu0 %v405
        %1105 = vmatprep.subr.mxu0 0.0
        %1106 = vmatpush1.msra.mxu0 %v406
        %1107 = vmatprep.subr.mxu0 0.0
        %1108 = vmatpush1.msra.mxu0 0.0
        %1109 = vmatprep.subr.mxu0 0.0
        %1110 = vmatpush1.msra.mxu0 0.0
        %1111 = vmatprep.subr.mxu0 0.0
        %1112 = vmatpush1.msra.mxu0 0.0
        %1113 = vmatprep.subr.mxu0 0.0
        %1114 = vmatpush1.msra.mxu0 0.0
        %1115 = vmatprep.subr.mxu0 0.0
        %1116 = vmatpush1.msra.mxu0 0.0
        %1117 = vmatprep.subr.mxu0 0.0
        %1118 = vmatpush1.msra.mxu0 0.0
        %1119 = vmatprep.subr.mxu0 0.0
        %1120 = vmatpush1.msra.mxu0 0.0
        %1121 = vmatprep.subr.mxu0 0.0
        %1122 = vmatpush1.msra.mxu0 0.0
        %1123 = vmatprep.subr.mxu0 0.0
        %1124 = vmatpush1.msra.mxu0 0.0
        %1125 = vmatprep.subr.mxu0 0.0
        %1126 = vmatpush1.msra.mxu0 0.0
        %1127 = vmatprep.subr.mxu0 0.0
        %1128 = vmatpush1.msra.mxu0 0.0
        %1129 = vmatprep.subr.mxu0 0.0
        %1130 = vmatpush1.msra.mxu0 0.0
        %1131 = vmatprep.subr.mxu0 0.0
        %1132 = vmatpush1.msra.mxu0 0.0
        %1133 = vmatprep.subr.mxu0 0.0
        %1134 = vmatpush1.msra.mxu0 0.0
        %1135 = vmatprep.subr.mxu0 0.0
        %1136 = vmatpush1.msra.mxu0 0.0
        %1137 = vmatprep.subr.mxu0 0.0
        %1138 = vmatpush1.msra.mxu0 0.0
        %1139 = vmatprep.mubr.f32.mxu0 0.0
        %1140 = vmatmul.mubr.f32.gmra.mrb[0].mxu0 %v1069
        %v1141 = vpop.f32.mrb[0].mxu0
        %v1142 = vadd.f32 0.0, %v1141
        %v1143 = vpop.f32.mrb[0].mxu0
        %1144 = vdwg.mxu0
        %v1145 = vadd.f32 %v1074, %v1142
        %v1146 = vtanh.pop %v1145
        %1147 = vst [vmem:[%s1073] sm:$0xff] %v1146
        %s1148 = scalar_lea.vmem %s349, 56 [#allocation9]
        %1149 = vst [vmem:[%s1148] sm:$0xff] %v1146
        %s1150 = sand.u32 %s182, 1
        %s1151 = scalar_lea.sflag [#allocation10], %s1150
        %s1152 = sand.u32 %s182, 1
        %s1153 = smul.addr %s1152, 64
        %s1154 = scalar_lea.vmem [#allocation9], %s1153
        // Predicated region
        $region58: #{tpu_custom_call.1} parent=35 // pred_check
          %p1155 = pneg %p164
        $region59: #{tpu_custom_call.1} parent=35 // pred_check_branch
          %1157 = sbr.rel (%p1155) target = $region61
        $region60: #{tpu_custom_call.1} parent=35 // pred_region
          %s1159 = ssub.s32 1024, 1024
          %1160 = vsyncadd [#allocation4], %s1159
          %s1161 = smul.addr %s32, 128
          %s1162 = scalar_lea.hbm %s5, %s1161
          %s1163 = sshll.u32 [#allocation8], 4
          %s1164 = int_to_ptr.vmem [resolvable:$true] %s1163
          %1169 = dma.vmem_to_hbm [thread:$0]  %s1164, 1024, %s1162, [#allocation4], 128, 128, 8
        $region61: #{tpu_custom_call.1} parent=35 // pred_fallthru
          _
        // Predicated region
        $region62: #{tpu_custom_call.1} parent=35 // pred_check
          %p1170 = pneg %p192
        $region63: #{tpu_custom_call.1} parent=35 // pred_check_branch
          %1172 = sbr.rel (%p1170) target = $region65
        $region64: #{tpu_custom_call.1} parent=35 // pred_region
          %s1174 = ssub.s32 1024, 1024
          %1175 = vsyncadd %s1151, %s1174
          %s1176 = smul.addr %s33, 8
          %s1177 = sadd.s32 %s32, %s1176
          %s1178 = smul.addr %s1177, 128
          %s1179 = scalar_lea.hbm %s6, %s1178
          %s1180 = sshll.u32 %s1154, 4
          %s1181 = int_to_ptr.vmem [resolvable:$true] %s1180
          %1186 = dma.vmem_to_hbm [thread:$0]  %s1181, 1024, %s1179, %s1151, 128, 128, 8
        $region65: #{tpu_custom_call.1} parent=35 // pred_fallthru
          _
        // Predicated region
        $region66: #{tpu_custom_call.1} parent=35 // pred_check
          %p1187 = pneg %p164
        $region67: #{tpu_custom_call.1} parent=35 // pred_check_branch
          %1189 = sbr.rel (%p1187) target = $region69
        $region68: #{tpu_custom_call.1} parent=35 // pred_region
          %1190 = dma.done [#allocation4], 1024
        $region69: #{tpu_custom_call.1} parent=35 // pred_fallthru
          _
      $region36: #{tpu_custom_call.1} parent=5 // pred_fallthru
        _
      %p1191 = scmp.le.s32.totalorder 2, %s23
      // Predicated region
      $region70: #{tpu_custom_call.1} parent=5 // pred_check
        %p1192 = pneg %p1191
      $region71: #{tpu_custom_call.1} parent=5 // pred_check_branch
        %1194 = sbr.rel (%p1192) target = $region73
      $region72: #{tpu_custom_call.1} parent=5 // pred_region
        %s1195 = ssub.s32 %s23, 2
        // Predicated region
        $region74: #{tpu_custom_call.1} parent=72 // pred_check
          %p1196 = pneg %p198
        $region75: #{tpu_custom_call.1} parent=72 // pred_check_branch
          %1198 = sbr.rel (%p1196) target = $region77
        $region76: #{tpu_custom_call.1} parent=72 // pred_region
          %s1199 = sand.u32 %s183, 1
          %s1200 = scalar_lea.sflag [#allocation10], %s1199
          %s1201 = sand.u32 %s183, 1
          %s1202 = smul.addr %s1201, 64
          %s1203 = scalar_lea.vmem [#allocation9], %s1202
          %1204 = dma.done %s1200, 1024
        $region77: #{tpu_custom_call.1} parent=72 // pred_fallthru
          _
      $region73: #{tpu_custom_call.1} parent=5 // pred_fallthru
        _
    $region6: #{tpu_custom_call.1} parent=1 // loop_footer
      %s27 = sadd.s32 1, %s23
    $region7: #{tpu_custom_call.1} parent=1 // loop_footer_branch
      %22 = sbr.rel target = $region3
    $region8: #{tpu_custom_call.1} parent=1 // loop_exit
      _
    %1205 = vsyncpa [#allocation3], 1
    %s1206 = scalar_lea.sflag [#allocation3], 1
    %1207 = vsyncpa %s1206, 1
    %1208 = vsyncpa [#allocation6], 1
    %s1209 = scalar_lea.sflag [#allocation6], 1
    %1210 = vsyncpa %s1209, 1
    %1211 = vsyncpa [#allocation4], 1
    %s1212 = scalar_lea.sflag [#allocation4], 1
    %1213 = vsyncpa %s1212, 1
    %1214 = vsyncpa [#allocation10], 1
    %s1215 = scalar_lea.sflag [#allocation10], 1
    %1216 = vsyncpa %s1215, 1

</llo_original>
